<compile_context>
chip_gen: v7x
topology: tpu7x:2x2x1
jax: 0.10.0
libtpu: 0.0.40
codegen_flags: <defaults>
</compile_context>

<pallas_src>
import jax
import jax.numpy as jnp
import numpy as np
from jax import lax
from jax.experimental import pallas as pl
from jax.experimental.pallas import tpu as pltpu

C_IN, C1, C2, C3 = 2, 64, 128, 256
K = 3  # kernel size


def _auto_block_b(B, Lp2):
    """Pick Bt (multiple of 8): target M=Bt*Lp2 ~1-2K rows, keep grid >= 2 if B allows."""
    target_rows = 2048
    bt = (target_rows // Lp2) // 8 * 8
    bt = max(8, min(128, bt))
    if B > 8:
        half = (-(-B // 2) + 7) // 8 * 8   # ceil(B/2) rounded up to a multiple of 8
        bt = min(bt, half)                 # grid length stays >= 2 (v7x: both TCs used)
    else:
        bt = 8
    return max(8, bt)


def cnn_feature_extractor(x_ncl, params, *, block_b=None, matmul_dtype=jnp.float32):
    """x_ncl: (B, 2, L) float32 (PyTorch NCL layout). Returns (B, 256) float32.

    block_b: batch elements per grid step (multiple of 8). None -> auto-select.
    matmul_dtype: operand dtype for the layer-2/3 MXU matmuls (accumulation is
    always f32). Use jnp.bfloat16 on v5e (or wherever a small accuracy tradeoff
    is acceptable).
    """
    w1, b1, w2, b2, w3, b3 = params
    B, cin, L = x_ncl.shape
    assert cin == C_IN

    Lp2 = L + 2
    Bt = _auto_block_b(B, Lp2) if block_b is None else block_b
    assert Bt % 8 == 0, "block_b must be a multiple of 8 (sublane alignment)"
    M = Bt * Lp2                                  # matmul M dimension per grid step
    assert M % 8 == 0

    Bp = pl.cdiv(B, Bt) * Bt                      # pad batch to a multiple of Bt
    if Bp != B:
        x_ncl = jnp.pad(x_ncl, ((0, Bp - B), (0, 0), (0, 0)))

    # NCL -> NLC, zero-pad length by 1 each side, flatten to one (Bp*(L+2), 2) slab.
    x_blc = jnp.transpose(x_ncl, (0, 2, 1))
    x_pad = jnp.pad(x_blc, ((0, 0), (1, 1), (0, 0)))
    x_flat = x_pad.reshape(Bp * Lp2, C_IN)

    mm = matmul_dtype
    # Weight prep (host/XLA side, once). Conv weights stored as (K, Cin, Cout).
    w1r = w1.reshape(K * C_IN, C1)                        # (6, 64), row = k*2 + cin
    w2r = w2.reshape(K * C1, C2).astype(mm)               # (192, 128)
    w3r = w3.reshape(K * C2, C3).astype(mm)               # (384, 256)
    b1r = b1.reshape(1, C1)
    b2r = b2.reshape(1, C2)
    b3r = b3.reshape(1, C3)

    # Tiny constant interior mask (M, 1): 1.0 on valid rows, 0.0 on the two zero-pad
    # rows of each element. Implements padding=1 AND isolates elements from the
    # roll wraparound. (Kept as an input: vector int mod has no cheap VPU form.)
    r_host = np.arange(M) % Lp2
    interior = ((r_host != 0) & (r_host != Lp2 - 1)).astype(np.float32).reshape(M, 1)
    interior = jnp.asarray(interior)

    inv_L = np.float32(1.0 / L)

    def kernel(x_ref, int_ref, w1_ref, b1_ref, w2_ref, b2_ref, w3_ref, b3_ref, o_ref):
        x = x_ref[...]                      # (M, 2) f32, pad rows already zero
        mask = int_ref[...]                 # (M, 1) f32

        def taps(h):
            # tap0[p]=h[p-1], tap1[p]=h[p], tap2[p]=h[p+1]; wraparound rows land on
            # masked pad rows so they never leak across batch elements.
            return pltpu.roll(h, 1, axis=0), h, pltpu.roll(h, M - 1, axis=0)

        # ---- Layer 1 (Cin=2): six VPU broadcast FMAs (a K=2 MXU matmul would waste
        # >98% of the contraction depth). Math in f32; single cast afterwards.
        w1m = w1_ref[...]                   # (6, 64), row = k*2 + cin
        t0, t1, t2 = taps(x)
        y1 = (b1_ref[...]
              + t0[:, 0:1] * w1m[0:1, :] + t0[:, 1:2] * w1m[1:2, :]
              + t1[:, 0:1] * w1m[2:3, :] + t1[:, 1:2] * w1m[3:4, :]
              + t2[:, 0:1] * w1m[4:5, :] + t2[:, 1:2] * w1m[5:6, :])
        h1 = (mask * jnp.maximum(y1, 0.0)).astype(mm)     # (M, 64), pad rows 0

        # ---- Layer 2: im2col concat (per-tap K=64 would underfill the MXU) -> one
        # K=192 matmul with f32 accumulation.
        t0, t1, t2 = taps(h1)
        hcat = jnp.concatenate((t0, t1, t2), axis=1)      # (M, 192)
        y2 = jnp.dot(hcat, w2_ref[...],
                     preferred_element_type=jnp.float32) + b2_ref[...]
        h2 = (mask * jnp.maximum(y2, 0.0)).astype(mm)     # (M, 128), pad rows 0

        # ---- Layer 3: three accumulating K=128 matmuls against static w3 slices.
        # Avoids the (M, 768) im2col temporary and its lane-offset stores.
        t0, t1, t2 = taps(h2)
        y3 = (jnp.dot(t0, w3_ref[0 * C2:1 * C2, :], preferred_element_type=jnp.float32)
              + jnp.dot(t1, w3_ref[1 * C2:2 * C2, :], preferred_element_type=jnp.float32)
              + jnp.dot(t2, w3_ref[2 * C2:3 * C2, :], preferred_element_type=jnp.float32)
              + b3_ref[...])
        h3 = jnp.maximum(y3, 0.0)           # no mask: pooling matrix excludes pad rows

        # ---- AdaptiveAvgPool1d(1): in-kernel (Bt, M) pooling matrix (iota + compares,
        # no int div/mod) @ h3 -> aligned (Bt, 256) output slab.
        row = lax.broadcasted_iota(jnp.int32, (Bt, M), 0)   # batch element within tile
        col = lax.broadcasted_iota(jnp.int32, (Bt, M), 1)   # flattened row index
        lo = row * Lp2
        in_elem = (col >= lo + 1) & (col <= lo + L)         # interior rows of element
        pool = jnp.where(in_elem, inv_L, jnp.float32(0.0))  # (Bt, M)
        o_ref[...] = jnp.dot(pool, h3, preferred_element_type=jnp.float32)

    grid_spec = pltpu.PrefetchScalarGridSpec(
        num_scalar_prefetch=0,
        grid=(Bp // Bt,),
        in_specs=[
            pl.BlockSpec((M, C_IN), lambda i: (i, 0)),        # x slab for this batch tile
            pl.BlockSpec((M, 1), lambda i: (0, 0)),           # interior mask (constant, tiny)
            pl.BlockSpec((K * C_IN, C1), lambda i: (0, 0)),   # w1 rows
            pl.BlockSpec((1, C1), lambda i: (0, 0)),
            pl.BlockSpec((K * C1, C2), lambda i: (0, 0)),     # w2 im2col
            pl.BlockSpec((1, C2), lambda i: (0, 0)),
            pl.BlockSpec((K * C2, C3), lambda i: (0, 0)),     # w3 (sliced per tap in-kernel)
            pl.BlockSpec((1, C3), lambda i: (0, 0)),
        ],
        out_specs=pl.BlockSpec((Bt, C3), lambda i: (i, 0)),   # aligned (Bt, 256) output slab
    )

    out = pl.pallas_call(
        kernel,
        out_shape=jax.ShapeDtypeStruct((Bp, C3), jnp.float32),
        grid_spec=grid_spec,
        compiler_params=pltpu.CompilerParams(
            dimension_semantics=("parallel",),
            vmem_limit_bytes=48 * 1024 * 1024,   # above v5e's 16 MiB scoped default, below v7x physical
        ),
    )(x_flat, interior, w1r, b1r, w2r, b2r, w3r, b3r)
    return out[:B]


def init_params(key):
    """Deterministic synthetic weights. Conv weights stored as (K, Cin, Cout)."""
    ks = jax.random.split(key, 6)

    def w(k, cin, cout):
        scale = 1.0 / jnp.sqrt(cin * K)
        return scale * jax.random.normal(k, (K, cin, cout), jnp.float32)

    def b(k, cout):
        return 0.1 * jax.random.normal(k, (cout,), jnp.float32)

    return (w(ks[0], C_IN, C1), b(ks[1], C1),
            w(ks[2], C1, C2), b(ks[3], C2),
            w(ks[4], C2, C3), b(ks[5], C3))


def reference(x_ncl, params):
    """Pure-JAX reference (NCL conv via lax.conv_general_dilated)."""
    w1, b1, w2, b2, w3, b3 = params

    def conv(x, w, b):
        w_oik = jnp.transpose(w, (2, 1, 0))   # (K, Cin, Cout) -> (Cout, Cin, K)
        y = lax.conv_general_dilated(
            x, w_oik, window_strides=(1,), padding=((1, 1),),
            dimension_numbers=("NCH", "OIH", "NCH"))
        return jax.nn.relu(y + b[None, :, None])

    h = conv(x_ncl, w1, b1)
    h = conv(h, w2, b2)
    h = conv(h, w3, b3)
    return jnp.mean(h, axis=-1)               # adaptive avg pool(1) + squeeze -> (B, 256)


if __name__ == "__main__":
    key = jax.random.PRNGKey(0)
    k_x, k_p = jax.random.split(key)

    B, L = 16, 16
    x = jax.random.normal(k_x, (B, C_IN, L), jnp.float32)   # PyTorch NCL input
    params = init_params(k_p)

    ref = jax.block_until_ready(reference(x, params))

    # f32 MXU path (auto block_b -> Bt=8, grid=2 here): exact module semantics.
    out = jax.block_until_ready(cnn_feature_extractor(x, params))
    assert out.shape == (B, C3), out.shape
    assert jnp.allclose(out, ref, atol=1e-4, rtol=1e-4), float(jnp.max(jnp.abs(out - ref)))

    # bf16 MXU operands for layers 2/3 (f32 accumulation): small accuracy tradeoff;
    # recommended default on v5e.
    out_bf16 = jax.block_until_ready(
        cnn_feature_extractor(x, params, block_b=8, matmul_dtype=jnp.bfloat16))
    assert jnp.allclose(out_bf16, ref, atol=5e-2, rtol=5e-2), \
        float(jnp.max(jnp.abs(out_bf16 - ref)))

    print("KERNEL_OK")
</pallas_src>

<mosaic_0001>
module attributes {stable_mosaic.version = 11 : i64} {
  func.func @kernel(%arg0: i32, %arg1: memref<144x2xf32, #tpu.memory_space<vmem>>, %arg2: memref<144x1xf32, #tpu.memory_space<vmem>>, %arg3: memref<6x64xf32, #tpu.memory_space<vmem>>, %arg4: memref<1x64xf32, #tpu.memory_space<vmem>>, %arg5: memref<192x128xf32, #tpu.memory_space<vmem>>, %arg6: memref<1x128xf32, #tpu.memory_space<vmem>>, %arg7: memref<384x256xf32, #tpu.memory_space<vmem>>, %arg8: memref<1x256xf32, #tpu.memory_space<vmem>>, %arg9: memref<8x256xf32, #tpu.memory_space<vmem>>) attributes {dimension_semantics = [#tpu.dimension_semantics<parallel>], iteration_bounds = array<i64: 2>, scalar_prefetch = 0 : i64, scratch_operands = 0 : i64, tpu.core_type = #tpu.core_type<tc>, window_params = [{transform_indices = @transform_0, window_bounds = array<i64: 144, 2>}, {pipeline_mode = #tpu.pipeline_mode<synchronous>, transform_indices = @transform_1, window_bounds = array<i64: 144, 1>}, {pipeline_mode = #tpu.pipeline_mode<synchronous>, transform_indices = @transform_2, window_bounds = array<i64: 6, 64>}, {pipeline_mode = #tpu.pipeline_mode<synchronous>, transform_indices = @transform_3, window_bounds = array<i64: 1, 64>}, {pipeline_mode = #tpu.pipeline_mode<synchronous>, transform_indices = @transform_4, window_bounds = array<i64: 192, 128>}, {pipeline_mode = #tpu.pipeline_mode<synchronous>, transform_indices = @transform_5, window_bounds = array<i64: 1, 128>}, {pipeline_mode = #tpu.pipeline_mode<synchronous>, transform_indices = @transform_6, window_bounds = array<i64: 384, 256>}, {pipeline_mode = #tpu.pipeline_mode<synchronous>, transform_indices = @transform_7, window_bounds = array<i64: 1, 256>}, {transform_indices = @transform_8, window_bounds = array<i64: 8, 256>}]} {
    %c0 = arith.constant 0 : index
    %c0_0 = arith.constant 0 : index
    %0 = vector.load %arg1[%c0, %c0_0] : memref<144x2xf32, #tpu.memory_space<vmem>>, vector<144x2xf32>
    %c0_1 = arith.constant 0 : index
    %c0_2 = arith.constant 0 : index
    %1 = vector.load %arg2[%c0_1, %c0_2] : memref<144x1xf32, #tpu.memory_space<vmem>>, vector<144x1xf32>
    %c0_3 = arith.constant 0 : index
    %c0_4 = arith.constant 0 : index
    %2 = vector.load %arg3[%c0_3, %c0_4] : memref<6x64xf32, #tpu.memory_space<vmem>>, vector<6x64xf32>
    %c1_i32 = arith.constant 1 : i32
    %3 = tpu.dynamic_rotate %0 by %c1_i32 dim 0 : vector<144x2xf32>, i32 -> vector<144x2xf32>
    %c143_i32 = arith.constant 143 : i32
    %4 = tpu.dynamic_rotate %0 by %c143_i32 dim 0 : vector<144x2xf32>, i32 -> vector<144x2xf32>
    %c0_5 = arith.constant 0 : index
    %c0_6 = arith.constant 0 : index
    %5 = vector.load %arg4[%c0_5, %c0_6] : memref<1x64xf32, #tpu.memory_space<vmem>>, vector<1x64xf32>
    %6 = vector.extract_strided_slice %3 {offsets = [0, 0], sizes = [144, 1], strides = [1, 1]} : vector<144x2xf32> to vector<144x1xf32>
    %7 = vector.extract_strided_slice %2 {offsets = [0, 0], sizes = [1, 64], strides = [1, 1]} : vector<6x64xf32> to vector<1x64xf32>
    %8 = vector.broadcast %6 : vector<144x1xf32> to vector<144x64xf32>
    %9 = vector.broadcast %7 : vector<1x64xf32> to vector<144x64xf32>
    %10 = arith.mulf %8, %9 : vector<144x64xf32>
    %11 = vector.broadcast %5 : vector<1x64xf32> to vector<144x64xf32>
    %12 = arith.addf %11, %10 : vector<144x64xf32>
    %13 = vector.extract_strided_slice %3 {offsets = [0, 1], sizes = [144, 1], strides = [1, 1]} : vector<144x2xf32> to vector<144x1xf32>
    %14 = vector.extract_strided_slice %2 {offsets = [1, 0], sizes = [1, 64], strides = [1, 1]} : vector<6x64xf32> to vector<1x64xf32>
    %15 = vector.broadcast %13 : vector<144x1xf32> to vector<144x64xf32>
    %16 = vector.broadcast %14 : vector<1x64xf32> to vector<144x64xf32>
    %17 = arith.mulf %15, %16 : vector<144x64xf32>
    %18 = arith.addf %12, %17 : vector<144x64xf32>
    %19 = vector.extract_strided_slice %0 {offsets = [0, 0], sizes = [144, 1], strides = [1, 1]} : vector<144x2xf32> to vector<144x1xf32>
    %20 = vector.extract_strided_slice %2 {offsets = [2, 0], sizes = [1, 64], strides = [1, 1]} : vector<6x64xf32> to vector<1x64xf32>
    %21 = vector.broadcast %19 : vector<144x1xf32> to vector<144x64xf32>
    %22 = vector.broadcast %20 : vector<1x64xf32> to vector<144x64xf32>
    %23 = arith.mulf %21, %22 : vector<144x64xf32>
    %24 = arith.addf %18, %23 : vector<144x64xf32>
    %25 = vector.extract_strided_slice %0 {offsets = [0, 1], sizes = [144, 1], strides = [1, 1]} : vector<144x2xf32> to vector<144x1xf32>
    %26 = vector.extract_strided_slice %2 {offsets = [3, 0], sizes = [1, 64], strides = [1, 1]} : vector<6x64xf32> to vector<1x64xf32>
    %27 = vector.broadcast %25 : vector<144x1xf32> to vector<144x64xf32>
    %28 = vector.broadcast %26 : vector<1x64xf32> to vector<144x64xf32>
    %29 = arith.mulf %27, %28 : vector<144x64xf32>
    %30 = arith.addf %24, %29 : vector<144x64xf32>
    %31 = vector.extract_strided_slice %4 {offsets = [0, 0], sizes = [144, 1], strides = [1, 1]} : vector<144x2xf32> to vector<144x1xf32>
    %32 = vector.extract_strided_slice %2 {offsets = [4, 0], sizes = [1, 64], strides = [1, 1]} : vector<6x64xf32> to vector<1x64xf32>
    %33 = vector.broadcast %31 : vector<144x1xf32> to vector<144x64xf32>
    %34 = vector.broadcast %32 : vector<1x64xf32> to vector<144x64xf32>
    %35 = arith.mulf %33, %34 : vector<144x64xf32>
    %36 = arith.addf %30, %35 : vector<144x64xf32>
    %37 = vector.extract_strided_slice %4 {offsets = [0, 1], sizes = [144, 1], strides = [1, 1]} : vector<144x2xf32> to vector<144x1xf32>
    %38 = vector.extract_strided_slice %2 {offsets = [5, 0], sizes = [1, 64], strides = [1, 1]} : vector<6x64xf32> to vector<1x64xf32>
    %39 = vector.broadcast %37 : vector<144x1xf32> to vector<144x64xf32>
    %40 = vector.broadcast %38 : vector<1x64xf32> to vector<144x64xf32>
    %41 = arith.mulf %39, %40 : vector<144x64xf32>
    %42 = arith.addf %36, %41 : vector<144x64xf32>
    %cst = arith.constant 0.000000e+00 : f32
    %43 = vector.broadcast %cst : f32 to vector<144x64xf32>
    %44 = arith.maximumf %42, %43 : vector<144x64xf32>
    %45 = vector.broadcast %1 : vector<144x1xf32> to vector<144x64xf32>
    %46 = arith.mulf %45, %44 : vector<144x64xf32>
    %c1_i32_7 = arith.constant 1 : i32
    %47 = tpu.dynamic_rotate %46 by %c1_i32_7 dim 0 : vector<144x64xf32>, i32 -> vector<144x64xf32>
    %c143_i32_8 = arith.constant 143 : i32
    %48 = tpu.dynamic_rotate %46 by %c143_i32_8 dim 0 : vector<144x64xf32>, i32 -> vector<144x64xf32>
    %49 = tpu.concatenate %47, %46, %48 in 1 : vector<144x64xf32>, vector<144x64xf32>, vector<144x64xf32> -> vector<144x192xf32>
    %c0_9 = arith.constant 0 : index
    %c0_10 = arith.constant 0 : index
    %50 = vector.load %arg5[%c0_9, %c0_10] : memref<192x128xf32, #tpu.memory_space<vmem>>, vector<192x128xf32>
    %cst_11 = arith.constant dense<0.000000e+00> : vector<144x128xf32>
    %51 = tpu.matmul %49, %50, %cst_11 {dimension_numbers = #tpu.dot_dimension_numbers<[1], [0], [0], [1], [0, 0, 1, 1], [], []>} : vector<144x192xf32>, vector<192x128xf32>, vector<144x128xf32> -> vector<144x128xf32>
    %c0_12 = arith.constant 0 : index
    %c0_13 = arith.constant 0 : index
    %52 = vector.load %arg6[%c0_12, %c0_13] : memref<1x128xf32, #tpu.memory_space<vmem>>, vector<1x128xf32>
    %53 = vector.broadcast %52 : vector<1x128xf32> to vector<144x128xf32>
    %54 = arith.addf %51, %53 : vector<144x128xf32>
    %cst_14 = arith.constant 0.000000e+00 : f32
    %55 = vector.broadcast %cst_14 : f32 to vector<144x128xf32>
    %56 = arith.maximumf %54, %55 : vector<144x128xf32>
    %57 = vector.broadcast %1 : vector<144x1xf32> to vector<144x128xf32>
    %58 = arith.mulf %57, %56 : vector<144x128xf32>
    %c1_i32_15 = arith.constant 1 : i32
    %59 = tpu.dynamic_rotate %58 by %c1_i32_15 dim 0 : vector<144x128xf32>, i32 -> vector<144x128xf32>
    %c143_i32_16 = arith.constant 143 : i32
    %60 = tpu.dynamic_rotate %58 by %c143_i32_16 dim 0 : vector<144x128xf32>, i32 -> vector<144x128xf32>
    %c0_17 = arith.constant 0 : index
    %c0_18 = arith.constant 0 : index
    %61 = vector.load %arg7[%c0_17, %c0_18] : memref<384x256xf32, #tpu.memory_space<vmem>>, vector<128x256xf32>
    %cst_19 = arith.constant dense<0.000000e+00> : vector<144x256xf32>
    %62 = tpu.matmul %59, %61, %cst_19 {dimension_numbers = #tpu.dot_dimension_numbers<[1], [0], [0], [1], [0, 0, 1, 1], [], []>} : vector<144x128xf32>, vector<128x256xf32>, vector<144x256xf32> -> vector<144x256xf32>
    %c128 = arith.constant 128 : index
    %c0_20 = arith.constant 0 : index
    %63 = vector.load %arg7[%c128, %c0_20] : memref<384x256xf32, #tpu.memory_space<vmem>>, vector<128x256xf32>
    %cst_21 = arith.constant dense<0.000000e+00> : vector<144x256xf32>
    %64 = tpu.matmul %58, %63, %cst_21 {dimension_numbers = #tpu.dot_dimension_numbers<[1], [0], [0], [1], [0, 0, 1, 1], [], []>} : vector<144x128xf32>, vector<128x256xf32>, vector<144x256xf32> -> vector<144x256xf32>
    %65 = arith.addf %62, %64 : vector<144x256xf32>
    %c256 = arith.constant 256 : index
    %c0_22 = arith.constant 0 : index
    %66 = vector.load %arg7[%c256, %c0_22] : memref<384x256xf32, #tpu.memory_space<vmem>>, vector<128x256xf32>
    %cst_23 = arith.constant dense<0.000000e+00> : vector<144x256xf32>
    %67 = tpu.matmul %60, %66, %cst_23 {dimension_numbers = #tpu.dot_dimension_numbers<[1], [0], [0], [1], [0, 0, 1, 1], [], []>} : vector<144x128xf32>, vector<128x256xf32>, vector<144x256xf32> -> vector<144x256xf32>
    %68 = arith.addf %65, %67 : vector<144x256xf32>
    %c0_24 = arith.constant 0 : index
    %c0_25 = arith.constant 0 : index
    %69 = vector.load %arg8[%c0_24, %c0_25] : memref<1x256xf32, #tpu.memory_space<vmem>>, vector<1x256xf32>
    %70 = vector.broadcast %69 : vector<1x256xf32> to vector<144x256xf32>
    %71 = arith.addf %68, %70 : vector<144x256xf32>
    %cst_26 = arith.constant 0.000000e+00 : f32
    %72 = vector.broadcast %cst_26 : f32 to vector<144x256xf32>
    %73 = arith.maximumf %71, %72 : vector<144x256xf32>
    %74 = tpu.iota {dimensions = array<i32: 0>} : vector<8x144xi32>
    %75 = tpu.iota {dimensions = array<i32: 1>} : vector<8x144xi32>
    %c18_i32 = arith.constant 18 : i32
    %76 = vector.broadcast %c18_i32 : i32 to vector<8x144xi32>
    %77 = arith.muli %74, %76 : vector<8x144xi32>
    %c1_i32_27 = arith.constant 1 : i32
    %78 = vector.broadcast %c1_i32_27 : i32 to vector<8x144xi32>
    %79 = arith.addi %77, %78 : vector<8x144xi32>
    %80 = arith.cmpi sge, %75, %79 : vector<8x144xi32>
    %c16_i32 = arith.constant 16 : i32
    %81 = vector.broadcast %c16_i32 : i32 to vector<8x144xi32>
    %82 = arith.addi %77, %81 : vector<8x144xi32>
    %83 = arith.cmpi sle, %75, %82 : vector<8x144xi32>
    %84 = arith.andi %80, %83 : vector<8x144xi1>
    %cst_28 = arith.constant 6.250000e-02 : f32
    %cst_29 = arith.constant 0.000000e+00 : f32
    %85 = vector.broadcast %cst_28 : f32 to vector<8x144xf32>
    %86 = vector.broadcast %cst_29 : f32 to vector<8x144xf32>
    %87 = arith.select %84, %85, %86 : vector<8x144xi1>, vector<8x144xf32>
    %cst_30 = arith.constant dense<0.000000e+00> : vector<8x256xf32>
    %88 = tpu.matmul %87, %73, %cst_30 {dimension_numbers = #tpu.dot_dimension_numbers<[1], [0], [0], [1], [0, 0, 1, 1], [], []>} : vector<8x144xf32>, vector<144x256xf32>, vector<8x256xf32> -> vector<8x256xf32>
    %c0_31 = arith.constant 0 : index
    %c0_32 = arith.constant 0 : index
    %89 = vector.load %arg9[%c0_31, %c0_32] : memref<8x256xf32, #tpu.memory_space<vmem>>, vector<8x256xf32>
    tpu.vector_store %arg9[%c0_31, %c0_32], %88 {strides = array<i32>} : memref<8x256xf32, #tpu.memory_space<vmem>>, vector<8x256xf32>,
    return
  }
  func.func @transform_0(%arg0: i32) -> (i32, i32) {
    %c0_i32 = arith.constant 0 : i32
    %c0_i32_0 = arith.constant 0 : i32
    return %arg0, %c0_i32 : i32, i32
  }
  func.func @transform_1(%arg0: i32) -> (i32, i32) {
    %c0_i32 = arith.constant 0 : i32
    %c0_i32_0 = arith.constant 0 : i32
    %c0_i32_1 = arith.constant 0 : i32
    return %c0_i32, %c0_i32_0 : i32, i32
  }
  func.func @transform_2(%arg0: i32) -> (i32, i32) {
    %c0_i32 = arith.constant 0 : i32
    %c0_i32_0 = arith.constant 0 : i32
    %c0_i32_1 = arith.constant 0 : i32
    return %c0_i32, %c0_i32_0 : i32, i32
  }
  func.func @transform_3(%arg0: i32) -> (i32, i32) {
    %c0_i32 = arith.constant 0 : i32
    %c0_i32_0 = arith.constant 0 : i32
    %c0_i32_1 = arith.constant 0 : i32
    return %c0_i32, %c0_i32_0 : i32, i32
  }
  func.func @transform_4(%arg0: i32) -> (i32, i32) {
    %c0_i32 = arith.constant 0 : i32
    %c0_i32_0 = arith.constant 0 : i32
    %c0_i32_1 = arith.constant 0 : i32
    return %c0_i32, %c0_i32_0 : i32, i32
  }
  func.func @transform_5(%arg0: i32) -> (i32, i32) {
    %c0_i32 = arith.constant 0 : i32
    %c0_i32_0 = arith.constant 0 : i32
    %c0_i32_1 = arith.constant 0 : i32
    return %c0_i32, %c0_i32_0 : i32, i32
  }
  func.func @transform_6(%arg0: i32) -> (i32, i32) {
    %c0_i32 = arith.constant 0 : i32
    %c0_i32_0 = arith.constant 0 : i32
    %c0_i32_1 = arith.constant 0 : i32
    return %c0_i32, %c0_i32_0 : i32, i32
  }
  func.func @transform_7(%arg0: i32) -> (i32, i32) {
    %c0_i32 = arith.constant 0 : i32
    %c0_i32_0 = arith.constant 0 : i32
    %c0_i32_1 = arith.constant 0 : i32
    return %c0_i32, %c0_i32_0 : i32, i32
  }
  func.func @transform_8(%arg0: i32) -> (i32, i32) {
    %c0_i32 = arith.constant 0 : i32
    %c0_i32_0 = arith.constant 0 : i32
    return %arg0, %c0_i32 : i32, i32
  }
}

</mosaic_0001>

<llo_original>
// kernel: tpu_custom_call.1
$region0: #{tpu_custom_call.1}
  #allocation0 [shape = 'u32[]', space=smem, size = 0x4, offset = 0x4, fixed_abs, tag = 'smem constant byte address 0x4 - core index']
  #allocation1 [shape = 'u32[144,128]{1,0:T(1,128)}', space=vmem, size = 0x12000, scoped, tag = 'internal scratch']
  %s0 = inlined_call_operand.vmem [shape: f32[288,2], index: 0, kind: input, shape index: {}]
  %s1 = inlined_call_operand.vmem [shape: f32[144,1], index: 1, kind: input, shape index: {}]
  %s2 = inlined_call_operand.vmem [shape: f32[6,64], index: 2, kind: input, shape index: {}]
  %s3 = inlined_call_operand.vmem [shape: f32[1,64], index: 3, kind: input, shape index: {}]
  %s4 = inlined_call_operand.vmem [shape: f32[192,128], index: 4, kind: input, shape index: {}]
  %s5 = inlined_call_operand.vmem [shape: f32[1,128], index: 5, kind: input, shape index: {}]
  %s6 = inlined_call_operand.hbm [shape: f32[384,256], index: 6, kind: input, shape index: {}]
  %s7 = inlined_call_operand.vmem [shape: f32[1,256], index: 7, kind: input, shape index: {}]
  %s8 = inlined_call_operand.hbm [shape: f32[16,256], index: 8, kind: output, shape index: {}]
  %s9 = sld [smem:[#allocation0]]
  $region69: #{tpu_custom_call.1} parent=0
    _
  %s11 = ssub.s32 1, %s9
  %s12 = scalar_select 0, %s11, %s9
  $region1: #{tpu_custom_call.1} parent=0
    #allocation2 [shape = 'u8[393216]{0}', space=vmem, size = 0x60000, scoped, tag = 'input window, operand 6, single buffered']
    #allocation3 [shape = 's32[2]{0}', space=sflag, size = 0x8, scoped, tag = 'scoped memory for tpu_custom_call.1']
    #allocation4 [shape = 's32[2]{0}', space=sflag, size = 0x8, scoped, tag = 'scoped memory for tpu_custom_call.1']
    #allocation5 [shape = 'u8[16384]{0}', space=vmem, size = 0x4000, scoped, tag = 'output window, operand 0']
    %13 = vsyncpa [#allocation3], 0
    %14 = vsyncpa [#allocation4], 0
    %s15 = scalar_lea.sflag [#allocation4], 1
    %16 = vsyncpa %s15, 0
    loop: start=0, step=1, limit=4
    $region2: #{tpu_custom_call.1} parent=1 // loop_pre_header
      _
    $region3: #{tpu_custom_call.1} parent=1 // loop_header
      %s18 = sphi 0, %s22
      %p19 = scmp.ge.s32.totalorder %s18, 4
      %s28 = sphi 0, %s30
      %s31 = sphi 0, %s28
      %s32 = sphi 0, %s31
      %s48 = sphi 0, %s32
      %s52 = sphi 0, %s52
      %s54 = sphi 0, %s52
      %s55 = sphi 0, %s54
      %s69 = sphi 0, %s55
      %s73 = sphi 0, %s73
      %s75 = sphi 0, %s73
      %s76 = sphi 0, %s75
      %s90 = sphi 0, %s76
      %s94 = sphi 0, %s94
      %s96 = sphi 0, %s94
      %s97 = sphi 0, %s96
      %s111 = sphi 0, %s97
      %s115 = sphi 0, %s115
      %s117 = sphi 0, %s115
      %s118 = sphi 0, %s117
      %s132 = sphi 0, %s118
      %s136 = sphi 0, %s136
      %s138 = sphi 0, %s136
      %s139 = sphi 0, %s138
      %s153 = sphi 0, %s139
      %s157 = sphi 0, %s157
      %s159 = sphi 0, %s157
      %s160 = sphi 0, %s159
      %s174 = sphi 0, %s160
      %s178 = sphi 0, %s178
      %s180 = sphi 0, %s178
      %s181 = sphi 0, %s180
      %s195 = sphi 0, %s181
      %s201 = sphi 0, %s203
      %s204 = sphi 0, %s201
      %s205 = sphi 0, %s204
      %s221 = sphi 0, %s205
    $region4: #{tpu_custom_call.1} parent=1 // loop_header_branch
      %21 = sbr.rel (%p19) target = $region8
    $region5: #{tpu_custom_call.1} parent=1 // loop_body
      %s23 = ssub.s32 %s18, 1
      %s24 = ssub.s32 %s18, 2
      %s25 = sadd.s32 %s18, 1
      %s26 = ssub.s32 %s18, %s25
      %p27 = scmp.eq.s32.totalorder %s26, 0
      %s29 = sadd.s32 %s28, 1
      %s30 = scalar_select %p27, %s28, %s29
      %p33 = pneg %p27
      %p34 = scmp.eq.s32.totalorder %s18, 1
      %p35 = por %p33, %p34
      %p36 = scmp.ne.s32.totalorder %s28, %s31
      %p37 = scmp.eq.s32.totalorder %s18, 0
      %p38 = por %p36, %p37
      %p39 = scmp.ne.s32.totalorder %s28, %s31
      %p40 = scmp.eq.s32.totalorder %s23, 1
      %p41 = por %p39, %p40
      %p42 = scmp.ne.s32.totalorder %s31, %s32
      %p43 = scmp.eq.s32.totalorder %s23, 0
      %p44 = por %p42, %p43
      %p45 = scmp.ne.s32.totalorder %s31, %s32
      %p46 = scmp.eq.s32.totalorder %s24, 1
      %p47 = por %p45, %p46
      %p49 = scmp.ne.s32.totalorder %s32, %s48
      %p50 = scmp.eq.s32.totalorder %s24, 0
      %p51 = por %p49, %p50
      %s53 = sadd.s32 %s52, 1
      %p56 = scmp.eq.s32.totalorder %s18, 1
      %p57 = scmp.ne.s32.totalorder %s52, %s54
      %p58 = scmp.eq.s32.totalorder %s18, 0
      %p59 = por %p57, %p58
      %p60 = scmp.ne.s32.totalorder %s52, %s54
      %p61 = scmp.eq.s32.totalorder %s23, 1
      %p62 = por %p60, %p61
      %p63 = scmp.ne.s32.totalorder %s54, %s55
      %p64 = scmp.eq.s32.totalorder %s23, 0
      %p65 = por %p63, %p64
      %p66 = scmp.ne.s32.totalorder %s54, %s55
      %p67 = scmp.eq.s32.totalorder %s24, 1
      %p68 = por %p66, %p67
      %p70 = scmp.ne.s32.totalorder %s55, %s69
      %p71 = scmp.eq.s32.totalorder %s24, 0
      %p72 = por %p70, %p71
      %s74 = sadd.s32 %s73, 1
      %p77 = scmp.eq.s32.totalorder %s18, 1
      %p78 = scmp.ne.s32.totalorder %s73, %s75
      %p79 = scmp.eq.s32.totalorder %s18, 0
      %p80 = por %p78, %p79
      %p81 = scmp.ne.s32.totalorder %s73, %s75
      %p82 = scmp.eq.s32.totalorder %s23, 1
      %p83 = por %p81, %p82
      %p84 = scmp.ne.s32.totalorder %s75, %s76
      %p85 = scmp.eq.s32.totalorder %s23, 0
      %p86 = por %p84, %p85
      %p87 = scmp.ne.s32.totalorder %s75, %s76
      %p88 = scmp.eq.s32.totalorder %s24, 1
      %p89 = por %p87, %p88
      %p91 = scmp.ne.s32.totalorder %s76, %s90
      %p92 = scmp.eq.s32.totalorder %s24, 0
      %p93 = por %p91, %p92
      %s95 = sadd.s32 %s94, 1
      %p98 = scmp.eq.s32.totalorder %s18, 1
      %p99 = scmp.ne.s32.totalorder %s94, %s96
      %p100 = scmp.eq.s32.totalorder %s18, 0
      %p101 = por %p99, %p100
      %p102 = scmp.ne.s32.totalorder %s94, %s96
      %p103 = scmp.eq.s32.totalorder %s23, 1
      %p104 = por %p102, %p103
      %p105 = scmp.ne.s32.totalorder %s96, %s97
      %p106 = scmp.eq.s32.totalorder %s23, 0
      %p107 = por %p105, %p106
      %p108 = scmp.ne.s32.totalorder %s96, %s97
      %p109 = scmp.eq.s32.totalorder %s24, 1
      %p110 = por %p108, %p109
      %p112 = scmp.ne.s32.totalorder %s97, %s111
      %p113 = scmp.eq.s32.totalorder %s24, 0
      %p114 = por %p112, %p113
      %s116 = sadd.s32 %s115, 1
      %p119 = scmp.eq.s32.totalorder %s18, 1
      %p120 = scmp.ne.s32.totalorder %s115, %s117
      %p121 = scmp.eq.s32.totalorder %s18, 0
      %p122 = por %p120, %p121
      %p123 = scmp.ne.s32.totalorder %s115, %s117
      %p124 = scmp.eq.s32.totalorder %s23, 1
      %p125 = por %p123, %p124
      %p126 = scmp.ne.s32.totalorder %s117, %s118
      %p127 = scmp.eq.s32.totalorder %s23, 0
      %p128 = por %p126, %p127
      %p129 = scmp.ne.s32.totalorder %s117, %s118
      %p130 = scmp.eq.s32.totalorder %s24, 1
      %p131 = por %p129, %p130
      %p133 = scmp.ne.s32.totalorder %s118, %s132
      %p134 = scmp.eq.s32.totalorder %s24, 0
      %p135 = por %p133, %p134
      %s137 = sadd.s32 %s136, 1
      %p140 = scmp.eq.s32.totalorder %s18, 1
      %p141 = scmp.ne.s32.totalorder %s136, %s138
      %p142 = scmp.eq.s32.totalorder %s18, 0
      %p143 = por %p141, %p142
      %p144 = scmp.ne.s32.totalorder %s136, %s138
      %p145 = scmp.eq.s32.totalorder %s23, 1
      %p146 = por %p144, %p145
      %p147 = scmp.ne.s32.totalorder %s138, %s139
      %p148 = scmp.eq.s32.totalorder %s23, 0
      %p149 = por %p147, %p148
      %p150 = scmp.ne.s32.totalorder %s138, %s139
      %p151 = scmp.eq.s32.totalorder %s24, 1
      %p152 = por %p150, %p151
      %p154 = scmp.ne.s32.totalorder %s139, %s153
      %p155 = scmp.eq.s32.totalorder %s24, 0
      %p156 = por %p154, %p155
      %s158 = sadd.s32 %s157, 1
      %p161 = scmp.eq.s32.totalorder %s18, 1
      %p162 = scmp.ne.s32.totalorder %s157, %s159
      %p163 = scmp.eq.s32.totalorder %s18, 0
      %p164 = por %p162, %p163
      %p165 = scmp.ne.s32.totalorder %s157, %s159
      %p166 = scmp.eq.s32.totalorder %s23, 1
      %p167 = por %p165, %p166
      %p168 = scmp.ne.s32.totalorder %s159, %s160
      %p169 = scmp.eq.s32.totalorder %s23, 0
      %p170 = por %p168, %p169
      %p171 = scmp.ne.s32.totalorder %s159, %s160
      %p172 = scmp.eq.s32.totalorder %s24, 1
      %p173 = por %p171, %p172
      %p175 = scmp.ne.s32.totalorder %s160, %s174
      %p176 = scmp.eq.s32.totalorder %s24, 0
      %p177 = por %p175, %p176
      %s179 = sadd.s32 %s178, 1
      %p182 = scmp.eq.s32.totalorder %s18, 1
      %p183 = scmp.ne.s32.totalorder %s178, %s180
      %p184 = scmp.eq.s32.totalorder %s18, 0
      %p185 = por %p183, %p184
      %p186 = scmp.ne.s32.totalorder %s178, %s180
      %p187 = scmp.eq.s32.totalorder %s23, 1
      %p188 = por %p186, %p187
      %p189 = scmp.ne.s32.totalorder %s180, %s181
      %p190 = scmp.eq.s32.totalorder %s23, 0
      %p191 = por %p189, %p190
      %p192 = scmp.ne.s32.totalorder %s180, %s181
      %p193 = scmp.eq.s32.totalorder %s24, 1
      %p194 = por %p192, %p193
      %p196 = scmp.ne.s32.totalorder %s181, %s195
      %p197 = scmp.eq.s32.totalorder %s24, 0
      %p198 = por %p196, %p197
      %s199 = ssub.s32 %s18, %s25
      %p200 = scmp.eq.s32.totalorder %s199, 0
      %s202 = sadd.s32 %s201, 1
      %s203 = scalar_select %p200, %s201, %s202
      %p206 = pneg %p200
      %p207 = scmp.eq.s32.totalorder %s18, 1
      %p208 = por %p206, %p207
      %p209 = scmp.ne.s32.totalorder %s201, %s204
      %p210 = scmp.eq.s32.totalorder %s18, 0
      %p211 = por %p209, %p210
      %p212 = scmp.ne.s32.totalorder %s201, %s204
      %p213 = scmp.eq.s32.totalorder %s23, 1
      %p214 = por %p212, %p213
      %p215 = scmp.ne.s32.totalorder %s204, %s205
      %p216 = scmp.eq.s32.totalorder %s23, 0
      %p217 = por %p215, %p216
      %p218 = scmp.ne.s32.totalorder %s204, %s205
      %p219 = scmp.eq.s32.totalorder %s24, 1
      %p220 = por %p218, %p219
      %p222 = scmp.ne.s32.totalorder %s205, %s221
      %p223 = scmp.eq.s32.totalorder %s24, 0
      %p224 = por %p222, %p223
      %p225 = scmp.le.s32.totalorder 1, %s18
      %p226 = scmp.lt.s32.totalorder %s18, 3
      %p227 = pnand %p225, %p226
      %p228 = pneg %p227
      // Predicated region
      $region9: #{tpu_custom_call.1} parent=5 // pred_check
        _
      $region10: #{tpu_custom_call.1} parent=5 // pred_check_branch
        %230 = sbr.rel (%p227) target = $region12
      $region11: #{tpu_custom_call.1} parent=5 // pred_region
        %s231 = ssub.s32 %s18, 1
        // Predicated region
        $region13: #{tpu_custom_call.1} parent=11 // pred_check
          %p232 = pneg %p65
        $region14: #{tpu_custom_call.1} parent=11 // pred_check_branch
          %234 = sbr.rel (%p232) target = $region16
        $region15: #{tpu_custom_call.1} parent=11 // pred_region
          _
        $region16: #{tpu_custom_call.1} parent=11 // pred_fallthru
          _
        // Predicated region
        $region17: #{tpu_custom_call.1} parent=11 // pred_check
          %p235 = pneg %p86
        $region18: #{tpu_custom_call.1} parent=11 // pred_check_branch
          %237 = sbr.rel (%p235) target = $region20
        $region19: #{tpu_custom_call.1} parent=11 // pred_region
          _
        $region20: #{tpu_custom_call.1} parent=11 // pred_fallthru
          _
        // Predicated region
        $region21: #{tpu_custom_call.1} parent=11 // pred_check
          %p238 = pneg %p107
        $region22: #{tpu_custom_call.1} parent=11 // pred_check_branch
          %240 = sbr.rel (%p238) target = $region24
        $region23: #{tpu_custom_call.1} parent=11 // pred_region
          _
        $region24: #{tpu_custom_call.1} parent=11 // pred_fallthru
          _
        // Predicated region
        $region25: #{tpu_custom_call.1} parent=11 // pred_check
          %p241 = pneg %p128
        $region26: #{tpu_custom_call.1} parent=11 // pred_check_branch
          %243 = sbr.rel (%p241) target = $region28
        $region27: #{tpu_custom_call.1} parent=11 // pred_region
          _
        $region28: #{tpu_custom_call.1} parent=11 // pred_fallthru
          _
        // Predicated region
        $region29: #{tpu_custom_call.1} parent=11 // pred_check
          %p244 = pneg %p149
        $region30: #{tpu_custom_call.1} parent=11 // pred_check_branch
          %246 = sbr.rel (%p244) target = $region32
        $region31: #{tpu_custom_call.1} parent=11 // pred_region
          _
        $region32: #{tpu_custom_call.1} parent=11 // pred_fallthru
          _
        // Predicated region
        $region33: #{tpu_custom_call.1} parent=11 // pred_check
          %p247 = pneg %p170
        $region34: #{tpu_custom_call.1} parent=11 // pred_check_branch
          %249 = sbr.rel (%p247) target = $region36
        $region35: #{tpu_custom_call.1} parent=11 // pred_region
          %s251 = ssub.s32 12288, 12288
          %252 = vsyncadd [#allocation3], %s251
          %s253 = sshll.u32 [#allocation2], 4
          %s254 = int_to_ptr.vmem [resolvable:$true] %s253
          %259 = dma.hbm_to_vmem [thread:$0]  %s6, 12288, %s254, [#allocation3], 256, 256, 16
        $region36: #{tpu_custom_call.1} parent=11 // pred_fallthru
          _
        // Predicated region
        $region37: #{tpu_custom_call.1} parent=11 // pred_check
          %p260 = pneg %p191
        $region38: #{tpu_custom_call.1} parent=11 // pred_check_branch
          %262 = sbr.rel (%p260) target = $region40
        $region39: #{tpu_custom_call.1} parent=11 // pred_region
          _
        $region40: #{tpu_custom_call.1} parent=11 // pred_fallthru
          _
      $region12: #{tpu_custom_call.1} parent=5 // pred_fallthru
        _
      %p263 = scmp.lt.s32.totalorder %s18, 2
      // Predicated region
      $region41: #{tpu_custom_call.1} parent=5 // pred_check
        %p264 = pneg %p263
      $region42: #{tpu_custom_call.1} parent=5 // pred_check_branch
        %266 = sbr.rel (%p264) target = $region44
      $region43: #{tpu_custom_call.1} parent=5 // pred_region
        // Predicated region
        $region45: #{tpu_custom_call.1} parent=43 // pred_check
          %p267 = pneg %p38
        $region46: #{tpu_custom_call.1} parent=43 // pred_check_branch
          %269 = sbr.rel (%p267) target = $region48
        $region47: #{tpu_custom_call.1} parent=43 // pred_region
          %s270 = smul.u32 18, %s18
          %p271 = scmp.lt.s32.totalorder %s270, 35
          %s272 = scalar_select %p271, %s270, 35
          %s273 = smul.addr %s272, 8
          %s274 = scalar_lea.vmem %s0, %s273
          %s275 = smul.u32 18, %s18
        $region48: #{tpu_custom_call.1} parent=43 // pred_fallthru
          _
      $region44: #{tpu_custom_call.1} parent=5 // pred_fallthru
        _
      %p276 = scmp.le.s32.totalorder 1, %s18
      %p277 = scmp.lt.s32.totalorder %s18, 3
      %p278 = pnand %p276, %p277
      %p279 = pneg %p278
      // Predicated region
      $region49: #{tpu_custom_call.1} parent=5 // pred_check
        _
      $region50: #{tpu_custom_call.1} parent=5 // pred_check_branch
        %281 = sbr.rel (%p278) target = $region52
      $region51: #{tpu_custom_call.1} parent=5 // pred_region
        %s282 = ssub.s32 %s18, 1
        // Predicated region
        $region53: #{tpu_custom_call.1} parent=51 // pred_check
          %p283 = pneg %p170
        $region54: #{tpu_custom_call.1} parent=51 // pred_check_branch
          %285 = sbr.rel (%p283) target = $region56
        $region55: #{tpu_custom_call.1} parent=51 // pred_region
          %286 = dma.done [#allocation3], 12288
        $region56: #{tpu_custom_call.1} parent=51 // pred_fallthru
          _
        %s287 = smul.u32 18, %s23
        %p288 = scmp.lt.s32.totalorder %s287, 35
        %s289 = scalar_select %p288, %s287, 35
        %s290 = smul.addr %s289, 8
        %s291 = scalar_lea.vmem %s0, %s290
        %p292 = pneg %p44
        %p293 = pneg %p41
        %p294 = pneg %p65
        %p295 = pneg %p62
        %p296 = pneg %p86
        %p297 = pneg %p83
        %p298 = pneg %p107
        %p299 = pneg %p104
        %p300 = pneg %p128
        %p301 = pneg %p125
        %p302 = pneg %p149
        %p303 = pneg %p146
        %p304 = pneg %p170
        %p305 = pneg %p167
        %p306 = pneg %p191
        %p307 = pneg %p188
        %p308 = pneg %p217
        %p309 = pneg %p214
        %s310 = sand.u32 %s204, 1
        %s311 = scalar_lea.sflag [#allocation4], %s310
        %s312 = sand.u32 %s204, 1
        %s313 = smul.addr %s312, 16
        %s314 = scalar_lea.vmem [#allocation5], %s313
        %s315 = smul.u32 18, %s23
        %p316 = scmp.lt.s32.totalorder %s315, 35
        %s317 = scalar_select %p316, %s315, 35
        %s318 = smul.addr %s317, 8
        %s319 = scalar_lea.vmem %s0, %s318
        %s320 = smul.u32 18, %s23
        %v321 = vld [vmem:[%s319] sm:$0xff]
        %v322 = vld [vmem:[%s319 + $0x8] sm:$0xff]
        %v323 = vld [vmem:[%s319 + $0x10] sm:$0xff]
        %v324 = vld [vmem:[%s319 + $0x18] sm:$0xff]
        %v325 = vld [vmem:[%s319 + $0x20] sm:$0xff]
        %v326 = vld [vmem:[%s319 + $0x28] sm:$0xff]
        %v327 = vld [vmem:[%s319 + $0x30] sm:$0xff]
        %v328 = vld [vmem:[%s319 + $0x38] sm:$0xff]
        %v329 = vld [vmem:[%s319 + $0x40] sm:$0xff]
        %v330 = vld [vmem:[%s319 + $0x48] sm:$0xff]
        %v331 = vld [vmem:[%s319 + $0x50] sm:$0xff]
        %v332 = vld [vmem:[%s319 + $0x58] sm:$0xff]
        %v333 = vld [vmem:[%s319 + $0x60] sm:$0xff]
        %v334 = vld [vmem:[%s319 + $0x68] sm:$0xff]
        %v335 = vld [vmem:[%s319 + $0x70] sm:$0xff]
        %v336 = vld [vmem:[%s319 + $0x78] sm:$0xff]
        %v337 = vld [vmem:[%s319 + $0x80] sm:$0xff]
        %v338 = vld [vmem:[%s319 + $0x88] sm:$0xff]
        %v339 = vld [vmem:[%s1] sm:$0xff]
        %v340 = vld [vmem:[%s1 + $0x8] sm:$0xff]
        %v341 = vld [vmem:[%s1 + $0x10] sm:$0xff]
        %v342 = vld [vmem:[%s1 + $0x18] sm:$0xff]
        %v343 = vld [vmem:[%s1 + $0x20] sm:$0xff]
        %v344 = vld [vmem:[%s1 + $0x28] sm:$0xff]
        %v345 = vld [vmem:[%s1 + $0x30] sm:$0xff]
        %v346 = vld [vmem:[%s1 + $0x38] sm:$0xff]
        %v347 = vld [vmem:[%s1 + $0x40] sm:$0xff]
        %v348 = vld [vmem:[%s1 + $0x48] sm:$0xff]
        %v349 = vld [vmem:[%s1 + $0x50] sm:$0xff]
        %v350 = vld [vmem:[%s1 + $0x58] sm:$0xff]
        %v351 = vld [vmem:[%s1 + $0x60] sm:$0xff]
        %v352 = vld [vmem:[%s1 + $0x68] sm:$0xff]
        %v353 = vld [vmem:[%s1 + $0x70] sm:$0xff]
        %v354 = vld [vmem:[%s1 + $0x78] sm:$0xff]
        %v355 = vld [vmem:[%s1 + $0x80] sm:$0xff]
        %v356 = vld [vmem:[%s1 + $0x88] sm:$0xff]
        %v357 = vld [vmem:[%s2] sm:$0x3f]
        %v358 = vrot.slane %v321, 7
        %v359 = vrot.slane %v322, 7
        %v360 = vrot.slane %v323, 7
        %v361 = vrot.slane %v324, 7
        %v362 = vrot.slane %v325, 7
        %v363 = vrot.slane %v326, 7
        %v364 = vrot.slane %v327, 7
        %v365 = vrot.slane %v328, 7
        %v366 = vrot.slane %v329, 7
        %v367 = vrot.slane %v330, 7
        %v368 = vrot.slane %v331, 7
        %v369 = vrot.slane %v332, 7
        %v370 = vrot.slane %v333, 7
        %v371 = vrot.slane %v334, 7
        %v372 = vrot.slane %v335, 7
        %v373 = vrot.slane %v336, 7
        %v374 = vrot.slane %v337, 7
        %v375 = vrot.slane %v338, 7
        %v376 = vlaneseq
        %v377 = vshrl.u32 %v376, 7
        %vm378 = vcmp.lt.s32.totalorder %v377, 1
        %v379 = vsel %vm378, %v374, %v375
        %v380 = vsel %vm378, %v373, %v374
        %v381 = vsel %vm378, %v372, %v373
        %v382 = vsel %vm378, %v371, %v372
        %v383 = vsel %vm378, %v370, %v371
        %v384 = vsel %vm378, %v369, %v370
        %v385 = vsel %vm378, %v368, %v369
        %v386 = vsel %vm378, %v367, %v368
        %v387 = vsel %vm378, %v366, %v367
        %v388 = vsel %vm378, %v365, %v366
        %v389 = vsel %vm378, %v364, %v365
        %v390 = vsel %vm378, %v363, %v364
        %v391 = vsel %vm378, %v362, %v363
        %v392 = vsel %vm378, %v361, %v362
        %v393 = vsel %vm378, %v360, %v361
        %v394 = vsel %vm378, %v359, %v360
        %v395 = vsel %vm378, %v358, %v359
        %v396 = vsel %vm378, %v375, %v358
        %v397 = vrot.slane %v321, 1
        %v398 = vrot.slane %v322, 1
        %v399 = vrot.slane %v323, 1
        %v400 = vrot.slane %v324, 1
        %v401 = vrot.slane %v325, 1
        %v402 = vrot.slane %v326, 1
        %v403 = vrot.slane %v327, 1
        %v404 = vrot.slane %v328, 1
        %v405 = vrot.slane %v329, 1
        %v406 = vrot.slane %v330, 1
        %v407 = vrot.slane %v331, 1
        %v408 = vrot.slane %v332, 1
        %v409 = vrot.slane %v333, 1
        %v410 = vrot.slane %v334, 1
        %v411 = vrot.slane %v335, 1
        %v412 = vrot.slane %v336, 1
        %v413 = vrot.slane %v337, 1
        %v414 = vrot.slane %v338, 1
        %vm415 = vcmp.lt.s32.totalorder %v377, 7
        %v416 = vsel %vm415, %v413, %v414
        %v417 = vsel %vm415, %v412, %v413
        %v418 = vsel %vm415, %v411, %v412
        %v419 = vsel %vm415, %v410, %v411
        %v420 = vsel %vm415, %v409, %v410
        %v421 = vsel %vm415, %v408, %v409
        %v422 = vsel %vm415, %v407, %v408
        %v423 = vsel %vm415, %v406, %v407
        %v424 = vsel %vm415, %v405, %v406
        %v425 = vsel %vm415, %v404, %v405
        %v426 = vsel %vm415, %v403, %v404
        %v427 = vsel %vm415, %v402, %v403
        %v428 = vsel %vm415, %v401, %v402
        %v429 = vsel %vm415, %v400, %v401
        %v430 = vsel %vm415, %v399, %v400
        %v431 = vsel %vm415, %v398, %v399
        %v432 = vsel %vm415, %v397, %v398
        %v433 = vsel %vm415, %v414, %v397
        %v434 = vld [vmem:[%s3] sm:$0x1]
        %436 = vset.pattern.permute.xlu0 0
        %437 = vperm.xlu0 %436, %v396
        %v438 = vpop.permute.xlu0 %437
        %441 = vset.pattern.permute.xlu0 0
        %442 = vperm.xlu0 %441, %v395
        %v443 = vpop.permute.xlu0 %442
        %446 = vset.pattern.permute.xlu0 0
        %447 = vperm.xlu0 %446, %v394
        %v448 = vpop.permute.xlu0 %447
        %451 = vset.pattern.permute.xlu0 0
        %452 = vperm.xlu0 %451, %v393
        %v453 = vpop.permute.xlu0 %452
        %456 = vset.pattern.permute.xlu0 0
        %457 = vperm.xlu0 %456, %v392
        %v458 = vpop.permute.xlu0 %457
        %461 = vset.pattern.permute.xlu0 0
        %462 = vperm.xlu0 %461, %v391
        %v463 = vpop.permute.xlu0 %462
        %466 = vset.pattern.permute.xlu0 0
        %467 = vperm.xlu0 %466, %v390
        %v468 = vpop.permute.xlu0 %467
        %471 = vset.pattern.permute.xlu0 0
        %472 = vperm.xlu0 %471, %v389
        %v473 = vpop.permute.xlu0 %472
        %476 = vset.pattern.permute.xlu0 0
        %477 = vperm.xlu0 %476, %v388
        %v478 = vpop.permute.xlu0 %477
        %481 = vset.pattern.permute.xlu0 0
        %482 = vperm.xlu0 %481, %v387
        %v483 = vpop.permute.xlu0 %482
        %486 = vset.pattern.permute.xlu0 0
        %487 = vperm.xlu0 %486, %v386
        %v488 = vpop.permute.xlu0 %487
        %491 = vset.pattern.permute.xlu0 0
        %492 = vperm.xlu0 %491, %v385
        %v493 = vpop.permute.xlu0 %492
        %496 = vset.pattern.permute.xlu0 0
        %497 = vperm.xlu0 %496, %v384
        %v498 = vpop.permute.xlu0 %497
        %501 = vset.pattern.permute.xlu0 0
        %502 = vperm.xlu0 %501, %v383
        %v503 = vpop.permute.xlu0 %502
        %506 = vset.pattern.permute.xlu0 0
        %507 = vperm.xlu0 %506, %v382
        %v508 = vpop.permute.xlu0 %507
        %511 = vset.pattern.permute.xlu0 0
        %512 = vperm.xlu0 %511, %v381
        %v513 = vpop.permute.xlu0 %512
        %516 = vset.pattern.permute.xlu0 0
        %517 = vperm.xlu0 %516, %v380
        %v518 = vpop.permute.xlu0 %517
        %521 = vset.pattern.permute.xlu0 0
        %522 = vperm.xlu0 %521, %v379
        %v523 = vpop.permute.xlu0 %522
        %v525 = vlaneseq
        %v526 = vshrl.u32 %v525, 7
        %v527 = vsub.s32 0, %v526
        %v528 = vrot.slane %v357, %v527
        %v529 = vmul.f32 %v438, %v528
        %v530 = vmul.f32 %v443, %v528
        %v531 = vmul.f32 %v448, %v528
        %v532 = vmul.f32 %v453, %v528
        %v533 = vmul.f32 %v458, %v528
        %v534 = vmul.f32 %v463, %v528
        %v535 = vmul.f32 %v468, %v528
        %v536 = vmul.f32 %v473, %v528
        %v537 = vmul.f32 %v478, %v528
        %v538 = vmul.f32 %v483, %v528
        %v539 = vmul.f32 %v488, %v528
        %v540 = vmul.f32 %v493, %v528
        %v541 = vmul.f32 %v498, %v528
        %v542 = vmul.f32 %v503, %v528
        %v543 = vmul.f32 %v508, %v528
        %v544 = vmul.f32 %v513, %v528
        %v545 = vmul.f32 %v518, %v528
        %v546 = vmul.f32 %v523, %v528
        %v548 = vlaneseq
        %v549 = vshrl.u32 %v548, 7
        %v550 = vsub.s32 0, %v549
        %v551 = vrot.slane %v434, %v550
        %v553 = vadd.f32 %v551, %v529
        %v554 = vadd.f32 %v551, %v530
        %v555 = vadd.f32 %v551, %v531
        %v556 = vadd.f32 %v551, %v532
        %v557 = vadd.f32 %v551, %v533
        %v558 = vadd.f32 %v551, %v534
        %v559 = vadd.f32 %v551, %v535
        %v560 = vadd.f32 %v551, %v536
        %v561 = vadd.f32 %v551, %v537
        %v562 = vadd.f32 %v551, %v538
        %v563 = vadd.f32 %v551, %v539
        %v564 = vadd.f32 %v551, %v540
        %v565 = vadd.f32 %v551, %v541
        %v566 = vadd.f32 %v551, %v542
        %v567 = vadd.f32 %v551, %v543
        %v568 = vadd.f32 %v551, %v544
        %v569 = vadd.f32 %v551, %v545
        %v570 = vadd.f32 %v551, %v546
        %571 = vset.pattern.permute.xlu0 1
        %572 = vperm.xlu0 %571, %v396
        %v573 = vpop.permute.xlu0 %572
        %575 = vset.pattern.permute.xlu0 1
        %576 = vperm.xlu0 %575, %v395
        %v577 = vpop.permute.xlu0 %576
        %579 = vset.pattern.permute.xlu0 1
        %580 = vperm.xlu0 %579, %v394
        %v581 = vpop.permute.xlu0 %580
        %583 = vset.pattern.permute.xlu0 1
        %584 = vperm.xlu0 %583, %v393
        %v585 = vpop.permute.xlu0 %584
        %587 = vset.pattern.permute.xlu0 1
        %588 = vperm.xlu0 %587, %v392
        %v589 = vpop.permute.xlu0 %588
        %591 = vset.pattern.permute.xlu0 1
        %592 = vperm.xlu0 %591, %v391
        %v593 = vpop.permute.xlu0 %592
        %595 = vset.pattern.permute.xlu0 1
        %596 = vperm.xlu0 %595, %v390
        %v597 = vpop.permute.xlu0 %596
        %599 = vset.pattern.permute.xlu0 1
        %600 = vperm.xlu0 %599, %v389
        %v601 = vpop.permute.xlu0 %600
        %603 = vset.pattern.permute.xlu0 1
        %604 = vperm.xlu0 %603, %v388
        %v605 = vpop.permute.xlu0 %604
        %607 = vset.pattern.permute.xlu0 1
        %608 = vperm.xlu0 %607, %v387
        %v609 = vpop.permute.xlu0 %608
        %611 = vset.pattern.permute.xlu0 1
        %612 = vperm.xlu0 %611, %v386
        %v613 = vpop.permute.xlu0 %612
        %615 = vset.pattern.permute.xlu0 1
        %616 = vperm.xlu0 %615, %v385
        %v617 = vpop.permute.xlu0 %616
        %619 = vset.pattern.permute.xlu0 1
        %620 = vperm.xlu0 %619, %v384
        %v621 = vpop.permute.xlu0 %620
        %623 = vset.pattern.permute.xlu0 1
        %624 = vperm.xlu0 %623, %v383
        %v625 = vpop.permute.xlu0 %624
        %627 = vset.pattern.permute.xlu0 1
        %628 = vperm.xlu0 %627, %v382
        %v629 = vpop.permute.xlu0 %628
        %631 = vset.pattern.permute.xlu0 1
        %632 = vperm.xlu0 %631, %v381
        %v633 = vpop.permute.xlu0 %632
        %635 = vset.pattern.permute.xlu0 1
        %636 = vperm.xlu0 %635, %v380
        %v637 = vpop.permute.xlu0 %636
        %639 = vset.pattern.permute.xlu0 1
        %640 = vperm.xlu0 %639, %v379
        %v641 = vpop.permute.xlu0 %640
        %v643 = vlaneseq
        %v644 = vshrl.u32 %v643, 7
        %v645 = vsub.s32 1, %v644
        %v646 = vrot.slane %v357, %v645
        %v647 = vmul.f32 %v573, %v646
        %v648 = vmul.f32 %v577, %v646
        %v649 = vmul.f32 %v581, %v646
        %v650 = vmul.f32 %v585, %v646
        %v651 = vmul.f32 %v589, %v646
        %v652 = vmul.f32 %v593, %v646
        %v653 = vmul.f32 %v597, %v646
        %v654 = vmul.f32 %v601, %v646
        %v655 = vmul.f32 %v605, %v646
        %v656 = vmul.f32 %v609, %v646
        %v657 = vmul.f32 %v613, %v646
        %v658 = vmul.f32 %v617, %v646
        %v659 = vmul.f32 %v621, %v646
        %v660 = vmul.f32 %v625, %v646
        %v661 = vmul.f32 %v629, %v646
        %v662 = vmul.f32 %v633, %v646
        %v663 = vmul.f32 %v637, %v646
        %v664 = vmul.f32 %v641, %v646
        %v665 = vadd.f32 %v553, %v647
        %v666 = vadd.f32 %v554, %v648
        %v667 = vadd.f32 %v555, %v649
        %v668 = vadd.f32 %v556, %v650
        %v669 = vadd.f32 %v557, %v651
        %v670 = vadd.f32 %v558, %v652
        %v671 = vadd.f32 %v559, %v653
        %v672 = vadd.f32 %v560, %v654
        %v673 = vadd.f32 %v561, %v655
        %v674 = vadd.f32 %v562, %v656
        %v675 = vadd.f32 %v563, %v657
        %v676 = vadd.f32 %v564, %v658
        %v677 = vadd.f32 %v565, %v659
        %v678 = vadd.f32 %v566, %v660
        %v679 = vadd.f32 %v567, %v661
        %v680 = vadd.f32 %v568, %v662
        %v681 = vadd.f32 %v569, %v663
        %v682 = vadd.f32 %v570, %v664
        %684 = vset.pattern.permute.xlu0 0
        %685 = vperm.xlu0 %684, %v321
        %v686 = vpop.permute.xlu0 %685
        %689 = vset.pattern.permute.xlu0 0
        %690 = vperm.xlu0 %689, %v322
        %v691 = vpop.permute.xlu0 %690
        %694 = vset.pattern.permute.xlu0 0
        %695 = vperm.xlu0 %694, %v323
        %v696 = vpop.permute.xlu0 %695
        %699 = vset.pattern.permute.xlu0 0
        %700 = vperm.xlu0 %699, %v324
        %v701 = vpop.permute.xlu0 %700
        %704 = vset.pattern.permute.xlu0 0
        %705 = vperm.xlu0 %704, %v325
        %v706 = vpop.permute.xlu0 %705
        %709 = vset.pattern.permute.xlu0 0
        %710 = vperm.xlu0 %709, %v326
        %v711 = vpop.permute.xlu0 %710
        %714 = vset.pattern.permute.xlu0 0
        %715 = vperm.xlu0 %714, %v327
        %v716 = vpop.permute.xlu0 %715
        %719 = vset.pattern.permute.xlu0 0
        %720 = vperm.xlu0 %719, %v328
        %v721 = vpop.permute.xlu0 %720
        %724 = vset.pattern.permute.xlu0 0
        %725 = vperm.xlu0 %724, %v329
        %v726 = vpop.permute.xlu0 %725
        %729 = vset.pattern.permute.xlu0 0
        %730 = vperm.xlu0 %729, %v330
        %v731 = vpop.permute.xlu0 %730
        %734 = vset.pattern.permute.xlu0 0
        %735 = vperm.xlu0 %734, %v331
        %v736 = vpop.permute.xlu0 %735
        %739 = vset.pattern.permute.xlu0 0
        %740 = vperm.xlu0 %739, %v332
        %v741 = vpop.permute.xlu0 %740
        %744 = vset.pattern.permute.xlu0 0
        %745 = vperm.xlu0 %744, %v333
        %v746 = vpop.permute.xlu0 %745
        %749 = vset.pattern.permute.xlu0 0
        %750 = vperm.xlu0 %749, %v334
        %v751 = vpop.permute.xlu0 %750
        %754 = vset.pattern.permute.xlu0 0
        %755 = vperm.xlu0 %754, %v335
        %v756 = vpop.permute.xlu0 %755
        %759 = vset.pattern.permute.xlu0 0
        %760 = vperm.xlu0 %759, %v336
        %v761 = vpop.permute.xlu0 %760
        %764 = vset.pattern.permute.xlu0 0
        %765 = vperm.xlu0 %764, %v337
        %v766 = vpop.permute.xlu0 %765
        %769 = vset.pattern.permute.xlu0 0
        %770 = vperm.xlu0 %769, %v338
        %v771 = vpop.permute.xlu0 %770
        %v773 = vlaneseq
        %v774 = vshrl.u32 %v773, 7
        %v775 = vsub.s32 2, %v774
        %v776 = vrot.slane %v357, %v775
        %v777 = vmul.f32 %v686, %v776
        %v778 = vmul.f32 %v691, %v776
        %v779 = vmul.f32 %v696, %v776
        %v780 = vmul.f32 %v701, %v776
        %v781 = vmul.f32 %v706, %v776
        %v782 = vmul.f32 %v711, %v776
        %v783 = vmul.f32 %v716, %v776
        %v784 = vmul.f32 %v721, %v776
        %v785 = vmul.f32 %v726, %v776
        %v786 = vmul.f32 %v731, %v776
        %v787 = vmul.f32 %v736, %v776
        %v788 = vmul.f32 %v741, %v776
        %v789 = vmul.f32 %v746, %v776
        %v790 = vmul.f32 %v751, %v776
        %v791 = vmul.f32 %v756, %v776
        %v792 = vmul.f32 %v761, %v776
        %v793 = vmul.f32 %v766, %v776
        %v794 = vmul.f32 %v771, %v776
        %v795 = vadd.f32 %v665, %v777
        %v796 = vadd.f32 %v666, %v778
        %v797 = vadd.f32 %v667, %v779
        %v798 = vadd.f32 %v668, %v780
        %v799 = vadd.f32 %v669, %v781
        %v800 = vadd.f32 %v670, %v782
        %v801 = vadd.f32 %v671, %v783
        %v802 = vadd.f32 %v672, %v784
        %v803 = vadd.f32 %v673, %v785
        %v804 = vadd.f32 %v674, %v786
        %v805 = vadd.f32 %v675, %v787
        %v806 = vadd.f32 %v676, %v788
        %v807 = vadd.f32 %v677, %v789
        %v808 = vadd.f32 %v678, %v790
        %v809 = vadd.f32 %v679, %v791
        %v810 = vadd.f32 %v680, %v792
        %v811 = vadd.f32 %v681, %v793
        %v812 = vadd.f32 %v682, %v794
        %813 = vset.pattern.permute.xlu0 1
        %814 = vperm.xlu0 %813, %v321
        %v815 = vpop.permute.xlu0 %814
        %817 = vset.pattern.permute.xlu0 1
        %818 = vperm.xlu0 %817, %v322
        %v819 = vpop.permute.xlu0 %818
        %821 = vset.pattern.permute.xlu0 1
        %822 = vperm.xlu0 %821, %v323
        %v823 = vpop.permute.xlu0 %822
        %825 = vset.pattern.permute.xlu0 1
        %826 = vperm.xlu0 %825, %v324
        %v827 = vpop.permute.xlu0 %826
        %829 = vset.pattern.permute.xlu0 1
        %830 = vperm.xlu0 %829, %v325
        %v831 = vpop.permute.xlu0 %830
        %833 = vset.pattern.permute.xlu0 1
        %834 = vperm.xlu0 %833, %v326
        %v835 = vpop.permute.xlu0 %834
        %837 = vset.pattern.permute.xlu0 1
        %838 = vperm.xlu0 %837, %v327
        %v839 = vpop.permute.xlu0 %838
        %841 = vset.pattern.permute.xlu0 1
        %842 = vperm.xlu0 %841, %v328
        %v843 = vpop.permute.xlu0 %842
        %845 = vset.pattern.permute.xlu0 1
        %846 = vperm.xlu0 %845, %v329
        %v847 = vpop.permute.xlu0 %846
        %849 = vset.pattern.permute.xlu0 1
        %850 = vperm.xlu0 %849, %v330
        %v851 = vpop.permute.xlu0 %850
        %853 = vset.pattern.permute.xlu0 1
        %854 = vperm.xlu0 %853, %v331
        %v855 = vpop.permute.xlu0 %854
        %857 = vset.pattern.permute.xlu0 1
        %858 = vperm.xlu0 %857, %v332
        %v859 = vpop.permute.xlu0 %858
        %861 = vset.pattern.permute.xlu0 1
        %862 = vperm.xlu0 %861, %v333
        %v863 = vpop.permute.xlu0 %862
        %865 = vset.pattern.permute.xlu0 1
        %866 = vperm.xlu0 %865, %v334
        %v867 = vpop.permute.xlu0 %866
        %869 = vset.pattern.permute.xlu0 1
        %870 = vperm.xlu0 %869, %v335
        %v871 = vpop.permute.xlu0 %870
        %873 = vset.pattern.permute.xlu0 1
        %874 = vperm.xlu0 %873, %v336
        %v875 = vpop.permute.xlu0 %874
        %877 = vset.pattern.permute.xlu0 1
        %878 = vperm.xlu0 %877, %v337
        %v879 = vpop.permute.xlu0 %878
        %881 = vset.pattern.permute.xlu0 1
        %882 = vperm.xlu0 %881, %v338
        %v883 = vpop.permute.xlu0 %882
        %v885 = vlaneseq
        %v886 = vshrl.u32 %v885, 7
        %v887 = vsub.s32 3, %v886
        %v888 = vrot.slane %v357, %v887
        %v889 = vmul.f32 %v815, %v888
        %v890 = vmul.f32 %v819, %v888
        %v891 = vmul.f32 %v823, %v888
        %v892 = vmul.f32 %v827, %v888
        %v893 = vmul.f32 %v831, %v888
        %v894 = vmul.f32 %v835, %v888
        %v895 = vmul.f32 %v839, %v888
        %v896 = vmul.f32 %v843, %v888
        %v897 = vmul.f32 %v847, %v888
        %v898 = vmul.f32 %v851, %v888
        %v899 = vmul.f32 %v855, %v888
        %v900 = vmul.f32 %v859, %v888
        %v901 = vmul.f32 %v863, %v888
        %v902 = vmul.f32 %v867, %v888
        %v903 = vmul.f32 %v871, %v888
        %v904 = vmul.f32 %v875, %v888
        %v905 = vmul.f32 %v879, %v888
        %v906 = vmul.f32 %v883, %v888
        %v907 = vadd.f32 %v795, %v889
        %v908 = vadd.f32 %v796, %v890
        %v909 = vadd.f32 %v797, %v891
        %v910 = vadd.f32 %v798, %v892
        %v911 = vadd.f32 %v799, %v893
        %v912 = vadd.f32 %v800, %v894
        %v913 = vadd.f32 %v801, %v895
        %v914 = vadd.f32 %v802, %v896
        %v915 = vadd.f32 %v803, %v897
        %v916 = vadd.f32 %v804, %v898
        %v917 = vadd.f32 %v805, %v899
        %v918 = vadd.f32 %v806, %v900
        %v919 = vadd.f32 %v807, %v901
        %v920 = vadd.f32 %v808, %v902
        %v921 = vadd.f32 %v809, %v903
        %v922 = vadd.f32 %v810, %v904
        %v923 = vadd.f32 %v811, %v905
        %v924 = vadd.f32 %v812, %v906
        %926 = vset.pattern.permute.xlu0 0
        %927 = vperm.xlu0 %926, %v432
        %v928 = vpop.permute.xlu0 %927
        %931 = vset.pattern.permute.xlu0 0
        %932 = vperm.xlu0 %931, %v431
        %v933 = vpop.permute.xlu0 %932
        %936 = vset.pattern.permute.xlu0 0
        %937 = vperm.xlu0 %936, %v430
        %v938 = vpop.permute.xlu0 %937
        %941 = vset.pattern.permute.xlu0 0
        %942 = vperm.xlu0 %941, %v429
        %v943 = vpop.permute.xlu0 %942
        %946 = vset.pattern.permute.xlu0 0
        %947 = vperm.xlu0 %946, %v428
        %v948 = vpop.permute.xlu0 %947
        %951 = vset.pattern.permute.xlu0 0
        %952 = vperm.xlu0 %951, %v427
        %v953 = vpop.permute.xlu0 %952
        %956 = vset.pattern.permute.xlu0 0
        %957 = vperm.xlu0 %956, %v426
        %v958 = vpop.permute.xlu0 %957
        %961 = vset.pattern.permute.xlu0 0
        %962 = vperm.xlu0 %961, %v425
        %v963 = vpop.permute.xlu0 %962
        %966 = vset.pattern.permute.xlu0 0
        %967 = vperm.xlu0 %966, %v424
        %v968 = vpop.permute.xlu0 %967
        %971 = vset.pattern.permute.xlu0 0
        %972 = vperm.xlu0 %971, %v423
        %v973 = vpop.permute.xlu0 %972
        %976 = vset.pattern.permute.xlu0 0
        %977 = vperm.xlu0 %976, %v422
        %v978 = vpop.permute.xlu0 %977
        %981 = vset.pattern.permute.xlu0 0
        %982 = vperm.xlu0 %981, %v421
        %v983 = vpop.permute.xlu0 %982
        %986 = vset.pattern.permute.xlu0 0
        %987 = vperm.xlu0 %986, %v420
        %v988 = vpop.permute.xlu0 %987
        %991 = vset.pattern.permute.xlu0 0
        %992 = vperm.xlu0 %991, %v419
        %v993 = vpop.permute.xlu0 %992
        %996 = vset.pattern.permute.xlu0 0
        %997 = vperm.xlu0 %996, %v418
        %v998 = vpop.permute.xlu0 %997
        %1001 = vset.pattern.permute.xlu0 0
        %1002 = vperm.xlu0 %1001, %v417
        %v1003 = vpop.permute.xlu0 %1002
        %1006 = vset.pattern.permute.xlu0 0
        %1007 = vperm.xlu0 %1006, %v416
        %v1008 = vpop.permute.xlu0 %1007
        %1011 = vset.pattern.permute.xlu0 0
        %1012 = vperm.xlu0 %1011, %v433
        %v1013 = vpop.permute.xlu0 %1012
        %v1015 = vlaneseq
        %v1016 = vshrl.u32 %v1015, 7
        %v1017 = vsub.s32 4, %v1016
        %v1018 = vrot.slane %v357, %v1017
        %v1019 = vmul.f32 %v928, %v1018
        %v1020 = vmul.f32 %v933, %v1018
        %v1021 = vmul.f32 %v938, %v1018
        %v1022 = vmul.f32 %v943, %v1018
        %v1023 = vmul.f32 %v948, %v1018
        %v1024 = vmul.f32 %v953, %v1018
        %v1025 = vmul.f32 %v958, %v1018
        %v1026 = vmul.f32 %v963, %v1018
        %v1027 = vmul.f32 %v968, %v1018
        %v1028 = vmul.f32 %v973, %v1018
        %v1029 = vmul.f32 %v978, %v1018
        %v1030 = vmul.f32 %v983, %v1018
        %v1031 = vmul.f32 %v988, %v1018
        %v1032 = vmul.f32 %v993, %v1018
        %v1033 = vmul.f32 %v998, %v1018
        %v1034 = vmul.f32 %v1003, %v1018
        %v1035 = vmul.f32 %v1008, %v1018
        %v1036 = vmul.f32 %v1013, %v1018
        %v1037 = vadd.f32 %v907, %v1019
        %v1038 = vadd.f32 %v908, %v1020
        %v1039 = vadd.f32 %v909, %v1021
        %v1040 = vadd.f32 %v910, %v1022
        %v1041 = vadd.f32 %v911, %v1023
        %v1042 = vadd.f32 %v912, %v1024
        %v1043 = vadd.f32 %v913, %v1025
        %v1044 = vadd.f32 %v914, %v1026
        %v1045 = vadd.f32 %v915, %v1027
        %v1046 = vadd.f32 %v916, %v1028
        %v1047 = vadd.f32 %v917, %v1029
        %v1048 = vadd.f32 %v918, %v1030
        %v1049 = vadd.f32 %v919, %v1031
        %v1050 = vadd.f32 %v920, %v1032
        %v1051 = vadd.f32 %v921, %v1033
        %v1052 = vadd.f32 %v922, %v1034
        %v1053 = vadd.f32 %v923, %v1035
        %v1054 = vadd.f32 %v924, %v1036
        %1055 = vset.pattern.permute.xlu0 1
        %1056 = vperm.xlu0 %1055, %v432
        %v1057 = vpop.permute.xlu0 %1056
        %1059 = vset.pattern.permute.xlu0 1
        %1060 = vperm.xlu0 %1059, %v431
        %v1061 = vpop.permute.xlu0 %1060
        %1063 = vset.pattern.permute.xlu0 1
        %1064 = vperm.xlu0 %1063, %v430
        %v1065 = vpop.permute.xlu0 %1064
        %1067 = vset.pattern.permute.xlu0 1
        %1068 = vperm.xlu0 %1067, %v429
        %v1069 = vpop.permute.xlu0 %1068
        %1071 = vset.pattern.permute.xlu0 1
        %1072 = vperm.xlu0 %1071, %v428
        %v1073 = vpop.permute.xlu0 %1072
        %1075 = vset.pattern.permute.xlu0 1
        %1076 = vperm.xlu0 %1075, %v427
        %v1077 = vpop.permute.xlu0 %1076
        %1079 = vset.pattern.permute.xlu0 1
        %1080 = vperm.xlu0 %1079, %v426
        %v1081 = vpop.permute.xlu0 %1080
        %1083 = vset.pattern.permute.xlu0 1
        %1084 = vperm.xlu0 %1083, %v425
        %v1085 = vpop.permute.xlu0 %1084
        %1087 = vset.pattern.permute.xlu0 1
        %1088 = vperm.xlu0 %1087, %v424
        %v1089 = vpop.permute.xlu0 %1088
        %1091 = vset.pattern.permute.xlu0 1
        %1092 = vperm.xlu0 %1091, %v423
        %v1093 = vpop.permute.xlu0 %1092
        %1095 = vset.pattern.permute.xlu0 1
        %1096 = vperm.xlu0 %1095, %v422
        %v1097 = vpop.permute.xlu0 %1096
        %1099 = vset.pattern.permute.xlu0 1
        %1100 = vperm.xlu0 %1099, %v421
        %v1101 = vpop.permute.xlu0 %1100
        %1103 = vset.pattern.permute.xlu0 1
        %1104 = vperm.xlu0 %1103, %v420
        %v1105 = vpop.permute.xlu0 %1104
        %1107 = vset.pattern.permute.xlu0 1
        %1108 = vperm.xlu0 %1107, %v419
        %v1109 = vpop.permute.xlu0 %1108
        %1111 = vset.pattern.permute.xlu0 1
        %1112 = vperm.xlu0 %1111, %v418
        %v1113 = vpop.permute.xlu0 %1112
        %1115 = vset.pattern.permute.xlu0 1
        %1116 = vperm.xlu0 %1115, %v417
        %v1117 = vpop.permute.xlu0 %1116
        %1119 = vset.pattern.permute.xlu0 1
        %1120 = vperm.xlu0 %1119, %v416
        %v1121 = vpop.permute.xlu0 %1120
        %1123 = vset.pattern.permute.xlu0 1
        %1124 = vperm.xlu0 %1123, %v433
        %v1125 = vpop.permute.xlu0 %1124
        %v1127 = vlaneseq
        %v1128 = vshrl.u32 %v1127, 7
        %v1129 = vsub.s32 5, %v1128
        %v1130 = vrot.slane %v357, %v1129
        %v1131 = vmul.f32 %v1057, %v1130
        %v1132 = vmul.f32 %v1061, %v1130
        %v1133 = vmul.f32 %v1065, %v1130
        %v1134 = vmul.f32 %v1069, %v1130
        %v1135 = vmul.f32 %v1073, %v1130
        %v1136 = vmul.f32 %v1077, %v1130
        %v1137 = vmul.f32 %v1081, %v1130
        %v1138 = vmul.f32 %v1085, %v1130
        %v1139 = vmul.f32 %v1089, %v1130
        %v1140 = vmul.f32 %v1093, %v1130
        %v1141 = vmul.f32 %v1097, %v1130
        %v1142 = vmul.f32 %v1101, %v1130
        %v1143 = vmul.f32 %v1105, %v1130
        %v1144 = vmul.f32 %v1109, %v1130
        %v1145 = vmul.f32 %v1113, %v1130
        %v1146 = vmul.f32 %v1117, %v1130
        %v1147 = vmul.f32 %v1121, %v1130
        %v1148 = vmul.f32 %v1125, %v1130
        %v1149 = vadd.f32 %v1037, %v1131
        %v1150 = vadd.f32 %v1038, %v1132
        %v1151 = vadd.f32 %v1039, %v1133
        %v1152 = vadd.f32 %v1040, %v1134
        %v1153 = vadd.f32 %v1041, %v1135
        %v1154 = vadd.f32 %v1042, %v1136
        %v1155 = vadd.f32 %v1043, %v1137
        %v1156 = vadd.f32 %v1044, %v1138
        %v1157 = vadd.f32 %v1045, %v1139
        %v1158 = vadd.f32 %v1046, %v1140
        %v1159 = vadd.f32 %v1047, %v1141
        %v1160 = vadd.f32 %v1048, %v1142
        %v1161 = vadd.f32 %v1049, %v1143
        %v1162 = vadd.f32 %v1050, %v1144
        %v1163 = vadd.f32 %v1051, %v1145
        %v1164 = vadd.f32 %v1052, %v1146
        %v1165 = vadd.f32 %v1053, %v1147
        %v1166 = vadd.f32 %v1054, %v1148
        %v1167 = vmax.f32 %v1149, 0.0
        %v1168 = vmax.f32 %v1150, 0.0
        %v1169 = vmax.f32 %v1151, 0.0
        %v1170 = vmax.f32 %v1152, 0.0
        %v1171 = vmax.f32 %v1153, 0.0
        %v1172 = vmax.f32 %v1154, 0.0
        %v1173 = vmax.f32 %v1155, 0.0
        %v1174 = vmax.f32 %v1156, 0.0
        %v1175 = vmax.f32 %v1157, 0.0
        %v1176 = vmax.f32 %v1158, 0.0
        %v1177 = vmax.f32 %v1159, 0.0
        %v1178 = vmax.f32 %v1160, 0.0
        %v1179 = vmax.f32 %v1161, 0.0
        %v1180 = vmax.f32 %v1162, 0.0
        %v1181 = vmax.f32 %v1163, 0.0
        %v1182 = vmax.f32 %v1164, 0.0
        %v1183 = vmax.f32 %v1165, 0.0
        %v1184 = vmax.f32 %v1166, 0.0
        %1186 = vset.pattern.permute.xlu0 0
        %1187 = vperm.xlu0 %1186, %v339
        %v1188 = vpop.permute.xlu0 %1187
        %1191 = vset.pattern.permute.xlu0 0
        %1192 = vperm.xlu0 %1191, %v340
        %v1193 = vpop.permute.xlu0 %1192
        %1196 = vset.pattern.permute.xlu0 0
        %1197 = vperm.xlu0 %1196, %v341
        %v1198 = vpop.permute.xlu0 %1197
        %1201 = vset.pattern.permute.xlu0 0
        %1202 = vperm.xlu0 %1201, %v342
        %v1203 = vpop.permute.xlu0 %1202
        %1206 = vset.pattern.permute.xlu0 0
        %1207 = vperm.xlu0 %1206, %v343
        %v1208 = vpop.permute.xlu0 %1207
        %1211 = vset.pattern.permute.xlu0 0
        %1212 = vperm.xlu0 %1211, %v344
        %v1213 = vpop.permute.xlu0 %1212
        %1216 = vset.pattern.permute.xlu0 0
        %1217 = vperm.xlu0 %1216, %v345
        %v1218 = vpop.permute.xlu0 %1217
        %1221 = vset.pattern.permute.xlu0 0
        %1222 = vperm.xlu0 %1221, %v346
        %v1223 = vpop.permute.xlu0 %1222
        %1226 = vset.pattern.permute.xlu0 0
        %1227 = vperm.xlu0 %1226, %v347
        %v1228 = vpop.permute.xlu0 %1227
        %1231 = vset.pattern.permute.xlu0 0
        %1232 = vperm.xlu0 %1231, %v348
        %v1233 = vpop.permute.xlu0 %1232
        %1236 = vset.pattern.permute.xlu0 0
        %1237 = vperm.xlu0 %1236, %v349
        %v1238 = vpop.permute.xlu0 %1237
        %1241 = vset.pattern.permute.xlu0 0
        %1242 = vperm.xlu0 %1241, %v350
        %v1243 = vpop.permute.xlu0 %1242
        %1246 = vset.pattern.permute.xlu0 0
        %1247 = vperm.xlu0 %1246, %v351
        %v1248 = vpop.permute.xlu0 %1247
        %1251 = vset.pattern.permute.xlu0 0
        %1252 = vperm.xlu0 %1251, %v352
        %v1253 = vpop.permute.xlu0 %1252
        %1256 = vset.pattern.permute.xlu0 0
        %1257 = vperm.xlu0 %1256, %v353
        %v1258 = vpop.permute.xlu0 %1257
        %1261 = vset.pattern.permute.xlu0 0
        %1262 = vperm.xlu0 %1261, %v354
        %v1263 = vpop.permute.xlu0 %1262
        %1266 = vset.pattern.permute.xlu0 0
        %1267 = vperm.xlu0 %1266, %v355
        %v1268 = vpop.permute.xlu0 %1267
        %1271 = vset.pattern.permute.xlu0 0
        %1272 = vperm.xlu0 %1271, %v356
        %v1273 = vpop.permute.xlu0 %1272
        %v1275 = vmul.f32 %v1188, %v1167
        %v1276 = vmul.f32 %v1193, %v1168
        %v1277 = vmul.f32 %v1198, %v1169
        %v1278 = vmul.f32 %v1203, %v1170
        %v1279 = vmul.f32 %v1208, %v1171
        %v1280 = vmul.f32 %v1213, %v1172
        %v1281 = vmul.f32 %v1218, %v1173
        %v1282 = vmul.f32 %v1223, %v1174
        %v1283 = vmul.f32 %v1228, %v1175
        %v1284 = vmul.f32 %v1233, %v1176
        %v1285 = vmul.f32 %v1238, %v1177
        %v1286 = vmul.f32 %v1243, %v1178
        %v1287 = vmul.f32 %v1248, %v1179
        %v1288 = vmul.f32 %v1253, %v1180
        %v1289 = vmul.f32 %v1258, %v1181
        %v1290 = vmul.f32 %v1263, %v1182
        %v1291 = vmul.f32 %v1268, %v1183
        %v1292 = vmul.f32 %v1273, %v1184
        %v1293 = vrot.slane %v1275, 7
        %v1294 = vrot.slane %v1276, 7
        %v1295 = vrot.slane %v1277, 7
        %v1296 = vrot.slane %v1278, 7
        %v1297 = vrot.slane %v1279, 7
        %v1298 = vrot.slane %v1280, 7
        %v1299 = vrot.slane %v1281, 7
        %v1300 = vrot.slane %v1282, 7
        %v1301 = vrot.slane %v1283, 7
        %v1302 = vrot.slane %v1284, 7
        %v1303 = vrot.slane %v1285, 7
        %v1304 = vrot.slane %v1286, 7
        %v1305 = vrot.slane %v1287, 7
        %v1306 = vrot.slane %v1288, 7
        %v1307 = vrot.slane %v1289, 7
        %v1308 = vrot.slane %v1290, 7
        %v1309 = vrot.slane %v1291, 7
        %v1310 = vrot.slane %v1292, 7
        %v1311 = vsel %vm378, %v1309, %v1310
        %v1312 = vsel %vm378, %v1308, %v1309
        %v1313 = vsel %vm378, %v1307, %v1308
        %v1314 = vsel %vm378, %v1306, %v1307
        %v1315 = vsel %vm378, %v1305, %v1306
        %v1316 = vsel %vm378, %v1304, %v1305
        %v1317 = vsel %vm378, %v1303, %v1304
        %v1318 = vsel %vm378, %v1302, %v1303
        %v1319 = vsel %vm378, %v1301, %v1302
        %v1320 = vsel %vm378, %v1300, %v1301
        %v1321 = vsel %vm378, %v1299, %v1300
        %v1322 = vsel %vm378, %v1298, %v1299
        %v1323 = vsel %vm378, %v1297, %v1298
        %v1324 = vsel %vm378, %v1296, %v1297
        %v1325 = vsel %vm378, %v1295, %v1296
        %v1326 = vsel %vm378, %v1294, %v1295
        %v1327 = vsel %vm378, %v1293, %v1294
        %v1328 = vsel %vm378, %v1310, %v1293
        %v1329 = vrot.slane %v1275, 1
        %v1330 = vrot.slane %v1276, 1
        %v1331 = vrot.slane %v1277, 1
        %v1332 = vrot.slane %v1278, 1
        %v1333 = vrot.slane %v1279, 1
        %v1334 = vrot.slane %v1280, 1
        %v1335 = vrot.slane %v1281, 1
        %v1336 = vrot.slane %v1282, 1
        %v1337 = vrot.slane %v1283, 1
        %v1338 = vrot.slane %v1284, 1
        %v1339 = vrot.slane %v1285, 1
        %v1340 = vrot.slane %v1286, 1
        %v1341 = vrot.slane %v1287, 1
        %v1342 = vrot.slane %v1288, 1
        %v1343 = vrot.slane %v1289, 1
        %v1344 = vrot.slane %v1290, 1
        %v1345 = vrot.slane %v1291, 1
        %v1346 = vrot.slane %v1292, 1
        %v1347 = vsel %vm415, %v1345, %v1346
        %v1348 = vsel %vm415, %v1344, %v1345
        %v1349 = vsel %vm415, %v1343, %v1344
        %v1350 = vsel %vm415, %v1342, %v1343
        %v1351 = vsel %vm415, %v1341, %v1342
        %v1352 = vsel %vm415, %v1340, %v1341
        %v1353 = vsel %vm415, %v1339, %v1340
        %v1354 = vsel %vm415, %v1338, %v1339
        %v1355 = vsel %vm415, %v1337, %v1338
        %v1356 = vsel %vm415, %v1336, %v1337
        %v1357 = vsel %vm415, %v1335, %v1336
        %v1358 = vsel %vm415, %v1334, %v1335
        %v1359 = vsel %vm415, %v1333, %v1334
        %v1360 = vsel %vm415, %v1332, %v1333
        %v1361 = vsel %vm415, %v1331, %v1332
        %v1362 = vsel %vm415, %v1330, %v1331
        %v1363 = vsel %vm415, %v1329, %v1330
        %v1364 = vsel %vm415, %v1346, %v1329
        %1383 = vrot.lane.b32.xlu0 %v1275, 64
        %v1384 = vpop.permute.xlu0 %1383
        %1385 = vrot.lane.b32.xlu0 %v1276, 64
        %v1386 = vpop.permute.xlu0 %1385
        %1387 = vrot.lane.b32.xlu0 %v1277, 64
        %v1388 = vpop.permute.xlu0 %1387
        %1389 = vrot.lane.b32.xlu0 %v1278, 64
        %v1390 = vpop.permute.xlu0 %1389
        %1391 = vrot.lane.b32.xlu0 %v1279, 64
        %v1392 = vpop.permute.xlu0 %1391
        %1393 = vrot.lane.b32.xlu0 %v1280, 64
        %v1394 = vpop.permute.xlu0 %1393
        %1395 = vrot.lane.b32.xlu0 %v1281, 64
        %v1396 = vpop.permute.xlu0 %1395
        %1397 = vrot.lane.b32.xlu0 %v1282, 64
        %v1398 = vpop.permute.xlu0 %1397
        %1399 = vrot.lane.b32.xlu0 %v1283, 64
        %v1400 = vpop.permute.xlu0 %1399
        %1401 = vrot.lane.b32.xlu0 %v1284, 64
        %v1402 = vpop.permute.xlu0 %1401
        %1403 = vrot.lane.b32.xlu0 %v1285, 64
        %v1404 = vpop.permute.xlu0 %1403
        %1405 = vrot.lane.b32.xlu0 %v1286, 64
        %v1406 = vpop.permute.xlu0 %1405
        %1407 = vrot.lane.b32.xlu0 %v1287, 64
        %v1408 = vpop.permute.xlu0 %1407
        %1409 = vrot.lane.b32.xlu0 %v1288, 64
        %v1410 = vpop.permute.xlu0 %1409
        %1411 = vrot.lane.b32.xlu0 %v1289, 64
        %v1412 = vpop.permute.xlu0 %1411
        %1413 = vrot.lane.b32.xlu0 %v1290, 64
        %v1414 = vpop.permute.xlu0 %1413
        %1415 = vrot.lane.b32.xlu0 %v1291, 64
        %v1416 = vpop.permute.xlu0 %1415
        %1417 = vrot.lane.b32.xlu0 %v1292, 64
        %v1418 = vpop.permute.xlu0 %1417
        %vm1437 = vcmask 523264
        %v1438 = vsel %vm1437, %v1328, %v1384
        %v1439 = vsel %vm1437, %v1327, %v1386
        %v1440 = vsel %vm1437, %v1326, %v1388
        %v1441 = vsel %vm1437, %v1325, %v1390
        %v1442 = vsel %vm1437, %v1324, %v1392
        %v1443 = vsel %vm1437, %v1323, %v1394
        %v1444 = vsel %vm1437, %v1322, %v1396
        %v1445 = vsel %vm1437, %v1321, %v1398
        %v1446 = vsel %vm1437, %v1320, %v1400
        %v1447 = vsel %vm1437, %v1319, %v1402
        %v1448 = vsel %vm1437, %v1318, %v1404
        %v1449 = vsel %vm1437, %v1317, %v1406
        %v1450 = vsel %vm1437, %v1316, %v1408
        %v1451 = vsel %vm1437, %v1315, %v1410
        %v1452 = vsel %vm1437, %v1314, %v1412
        %v1453 = vsel %vm1437, %v1313, %v1414
        %v1454 = vsel %vm1437, %v1312, %v1416
        %v1455 = vsel %vm1437, %v1311, %v1418
        %v1456 = vld [vmem:[%s4] sm:$0xff]
        %v1457 = vld [vmem:[%s4 + $0x8] sm:$0xff]
        %v1458 = vld [vmem:[%s4 + $0x10] sm:$0xff]
        %v1459 = vld [vmem:[%s4 + $0x18] sm:$0xff]
        %v1460 = vld [vmem:[%s4 + $0x20] sm:$0xff]
        %v1461 = vld [vmem:[%s4 + $0x28] sm:$0xff]
        %v1462 = vld [vmem:[%s4 + $0x30] sm:$0xff]
        %v1463 = vld [vmem:[%s4 + $0x38] sm:$0xff]
        %v1464 = vld [vmem:[%s4 + $0x40] sm:$0xff]
        %v1465 = vld [vmem:[%s4 + $0x48] sm:$0xff]
        %v1466 = vld [vmem:[%s4 + $0x50] sm:$0xff]
        %v1467 = vld [vmem:[%s4 + $0x58] sm:$0xff]
        %v1468 = vld [vmem:[%s4 + $0x60] sm:$0xff]
        %v1469 = vld [vmem:[%s4 + $0x68] sm:$0xff]
        %v1470 = vld [vmem:[%s4 + $0x70] sm:$0xff]
        %v1471 = vld [vmem:[%s4 + $0x78] sm:$0xff]
        %v1472 = vld [vmem:[%s4 + $0x80] sm:$0xff]
        %v1473 = vld [vmem:[%s4 + $0x88] sm:$0xff]
        %v1474 = vld [vmem:[%s4 + $0x90] sm:$0xff]
        %v1475 = vld [vmem:[%s4 + $0x98] sm:$0xff]
        %v1476 = vld [vmem:[%s4 + $0xa0] sm:$0xff]
        %v1477 = vld [vmem:[%s4 + $0xa8] sm:$0xff]
        %v1478 = vld [vmem:[%s4 + $0xb0] sm:$0xff]
        %v1479 = vld [vmem:[%s4 + $0xb8] sm:$0xff]
        %v1480 = vld [vmem:[%s5] sm:$0x1]
        %v1482 = vlaneseq
        %v1483 = vshrl.u32 %v1482, 7
        %v1484 = vsub.s32 0, %v1483
        %v1485 = vrot.slane %v1480, %v1484
        %v1488 = vsel %vm1437, %v1363, 0
        %v1491 = vsel %vm1437, %v1362, 0
        %v1494 = vsel %vm1437, %v1361, 0
        %v1497 = vsel %vm1437, %v1360, 0
        %v1500 = vsel %vm1437, %v1359, 0
        %v1503 = vsel %vm1437, %v1358, 0
        %v1506 = vsel %vm1437, %v1357, 0
        %v1509 = vsel %vm1437, %v1356, 0
        %v1512 = vsel %vm1437, %v1355, 0
        %v1515 = vsel %vm1437, %v1354, 0
        %v1518 = vsel %vm1437, %v1353, 0
        %v1521 = vsel %vm1437, %v1352, 0
        %v1524 = vsel %vm1437, %v1351, 0
        %v1527 = vsel %vm1437, %v1350, 0
        %v1530 = vsel %vm1437, %v1349, 0
        %v1533 = vsel %vm1437, %v1348, 0
        %v1536 = vsel %vm1437, %v1347, 0
        %v1539 = vsel %vm1437, %v1364, 0
        %1541 = vmatprep.subr.mxu0 0.0
        %1542 = vmatpush1.msra.mxu0 %v1456
        %1543 = vmatprep.subr.mxu0 0.0
        %1544 = vmatpush1.msra.mxu0 %v1457
        %1545 = vmatprep.subr.mxu0 0.0
        %1546 = vmatpush1.msra.mxu0 %v1458
        %1547 = vmatprep.subr.mxu0 0.0
        %1548 = vmatpush1.msra.mxu0 %v1459
        %1549 = vmatprep.subr.mxu0 0.0
        %1550 = vmatpush1.msra.mxu0 %v1460
        %1551 = vmatprep.subr.mxu0 0.0
        %1552 = vmatpush1.msra.mxu0 %v1461
        %1553 = vmatprep.subr.mxu0 0.0
        %1554 = vmatpush1.msra.mxu0 %v1462
        %1555 = vmatprep.subr.mxu0 0.0
        %1556 = vmatpush1.msra.mxu0 %v1463
        %1557 = vmatprep.subr.mxu0 0.0
        %1558 = vmatpush1.msra.mxu0 %v1464
        %1559 = vmatprep.subr.mxu0 0.0
        %1560 = vmatpush1.msra.mxu0 %v1465
        %1561 = vmatprep.subr.mxu0 0.0
        %1562 = vmatpush1.msra.mxu0 %v1466
        %1563 = vmatprep.subr.mxu0 0.0
        %1564 = vmatpush1.msra.mxu0 %v1467
        %1565 = vmatprep.subr.mxu0 0.0
        %1566 = vmatpush1.msra.mxu0 %v1468
        %1567 = vmatprep.subr.mxu0 0.0
        %1568 = vmatpush1.msra.mxu0 %v1469
        %1569 = vmatprep.subr.mxu0 0.0
        %1570 = vmatpush1.msra.mxu0 %v1470
        %1571 = vmatprep.subr.mxu0 0.0
        %1572 = vmatpush1.msra.mxu0 %v1471
        %1573 = vmatprep.subr.mxu0 0.0
        %1574 = vmatpush1.msra.mxu0 %v1472
        %1575 = vmatprep.subr.mxu0 0.0
        %1576 = vmatpush1.msra.mxu0 %v1473
        %1577 = vmatprep.subr.mxu0 0.0
        %1578 = vmatpush1.msra.mxu0 %v1474
        %1579 = vmatprep.subr.mxu0 0.0
        %1580 = vmatpush1.msra.mxu0 %v1475
        %1581 = vmatprep.subr.mxu0 0.0
        %1582 = vmatpush1.msra.mxu0 %v1476
        %1583 = vmatprep.subr.mxu0 0.0
        %1584 = vmatpush1.msra.mxu0 %v1477
        %1585 = vmatprep.subr.mxu0 0.0
        %1586 = vmatpush1.msra.mxu0 %v1478
        %1587 = vmatprep.subr.mxu0 0.0
        %1588 = vmatpush1.msra.mxu0 %v1479
        %1589 = vmatprep.subr.mxu0 0.0
        %1590 = vmatpush1.msra.mxu0 0.0
        %1591 = vmatprep.subr.mxu0 0.0
        %1592 = vmatpush1.msra.mxu0 0.0
        %1593 = vmatprep.subr.mxu0 0.0
        %1594 = vmatpush1.msra.mxu0 0.0
        %1595 = vmatprep.subr.mxu0 0.0
        %1596 = vmatpush1.msra.mxu0 0.0
        %1597 = vmatprep.subr.mxu0 0.0
        %1598 = vmatpush1.msra.mxu0 0.0
        %1599 = vmatprep.subr.mxu0 0.0
        %1600 = vmatpush1.msra.mxu0 0.0
        %1601 = vmatprep.subr.mxu0 0.0
        %1602 = vmatpush1.msra.mxu0 0.0
        %1603 = vmatprep.subr.mxu0 0.0
        %1604 = vmatpush1.msra.mxu0 0.0
        %1605 = vmatprep.mubr.f32.mxu0 %v1488
        %1606 = vmatmul.mubr.f32.gmra.mrb[0].mxu0 %v1438
        %v1607 = vpop.f32.mrb[0].mxu0
        %v1608 = vadd.f32 %v1485, %v1607
        %v1609 = vpop.f32.mrb[0].mxu0
        %1610 = vmatprep.mubr.f32.mxu0 %v1491
        %1611 = vmatmul.mubr.f32.gmra.mrb[0].mxu0 %v1439
        %v1612 = vpop.f32.mrb[0].mxu0
        %v1613 = vadd.f32 %v1485, %v1612
        %v1614 = vpop.f32.mrb[0].mxu0
        %1615 = vmatprep.mubr.f32.mxu0 %v1494
        %1616 = vmatmul.mubr.f32.gmra.mrb[0].mxu0 %v1440
        %v1617 = vpop.f32.mrb[0].mxu0
        %v1618 = vadd.f32 %v1485, %v1617
        %v1619 = vpop.f32.mrb[0].mxu0
        %1620 = vmatprep.mubr.f32.mxu0 %v1497
        %1621 = vmatmul.mubr.f32.gmra.mrb[0].mxu0 %v1441
        %v1622 = vpop.f32.mrb[0].mxu0
        %v1623 = vadd.f32 %v1485, %v1622
        %v1624 = vpop.f32.mrb[0].mxu0
        %1625 = vmatprep.mubr.f32.mxu0 %v1500
        %1626 = vmatmul.mubr.f32.gmra.mrb[0].mxu0 %v1442
        %v1627 = vpop.f32.mrb[0].mxu0
        %v1628 = vadd.f32 %v1485, %v1627
        %v1629 = vpop.f32.mrb[0].mxu0
        %1630 = vmatprep.mubr.f32.mxu0 %v1503
        %1631 = vmatmul.mubr.f32.gmra.mrb[0].mxu0 %v1443
        %v1632 = vpop.f32.mrb[0].mxu0
        %v1633 = vadd.f32 %v1485, %v1632
        %v1634 = vpop.f32.mrb[0].mxu0
        %1635 = vmatprep.mubr.f32.mxu0 %v1506
        %1636 = vmatmul.mubr.f32.gmra.mrb[0].mxu0 %v1444
        %v1637 = vpop.f32.mrb[0].mxu0
        %v1638 = vadd.f32 %v1485, %v1637
        %v1639 = vpop.f32.mrb[0].mxu0
        %1640 = vmatprep.mubr.f32.mxu0 %v1509
        %1641 = vmatmul.mubr.f32.gmra.mrb[0].mxu0 %v1445
        %v1642 = vpop.f32.mrb[0].mxu0
        %v1643 = vadd.f32 %v1485, %v1642
        %v1644 = vpop.f32.mrb[0].mxu0
        %1645 = vmatprep.mubr.f32.mxu0 %v1512
        %1646 = vmatmul.mubr.f32.gmra.mrb[0].mxu0 %v1446
        %v1647 = vpop.f32.mrb[0].mxu0
        %v1648 = vadd.f32 %v1485, %v1647
        %v1649 = vpop.f32.mrb[0].mxu0
        %1650 = vmatprep.mubr.f32.mxu0 %v1515
        %1651 = vmatmul.mubr.f32.gmra.mrb[0].mxu0 %v1447
        %v1652 = vpop.f32.mrb[0].mxu0
        %v1653 = vadd.f32 %v1485, %v1652
        %v1654 = vpop.f32.mrb[0].mxu0
        %1655 = vmatprep.mubr.f32.mxu0 %v1518
        %1656 = vmatmul.mubr.f32.gmra.mrb[0].mxu0 %v1448
        %v1657 = vpop.f32.mrb[0].mxu0
        %v1658 = vadd.f32 %v1485, %v1657
        %v1659 = vpop.f32.mrb[0].mxu0
        %1660 = vmatprep.mubr.f32.mxu0 %v1521
        %1661 = vmatmul.mubr.f32.gmra.mrb[0].mxu0 %v1449
        %v1662 = vpop.f32.mrb[0].mxu0
        %v1663 = vadd.f32 %v1485, %v1662
        %v1664 = vpop.f32.mrb[0].mxu0
        %1665 = vmatprep.mubr.f32.mxu0 %v1524
        %1666 = vmatmul.mubr.f32.gmra.mrb[0].mxu0 %v1450
        %v1667 = vpop.f32.mrb[0].mxu0
        %v1668 = vadd.f32 %v1485, %v1667
        %v1669 = vpop.f32.mrb[0].mxu0
        %1670 = vmatprep.mubr.f32.mxu0 %v1527
        %1671 = vmatmul.mubr.f32.gmra.mrb[0].mxu0 %v1451
        %v1672 = vpop.f32.mrb[0].mxu0
        %v1673 = vadd.f32 %v1485, %v1672
        %v1674 = vpop.f32.mrb[0].mxu0
        %1675 = vmatprep.mubr.f32.mxu0 %v1530
        %1676 = vmatmul.mubr.f32.gmra.mrb[0].mxu0 %v1452
        %v1677 = vpop.f32.mrb[0].mxu0
        %v1678 = vadd.f32 %v1485, %v1677
        %v1679 = vpop.f32.mrb[0].mxu0
        %1680 = vmatprep.mubr.f32.mxu0 %v1533
        %1681 = vmatmul.mubr.f32.gmra.mrb[0].mxu0 %v1453
        %v1682 = vpop.f32.mrb[0].mxu0
        %v1683 = vadd.f32 %v1485, %v1682
        %v1684 = vpop.f32.mrb[0].mxu0
        %1685 = vmatprep.mubr.f32.mxu0 %v1536
        %1686 = vmatmul.mubr.f32.gmra.mrb[0].mxu0 %v1454
        %v1687 = vpop.f32.mrb[0].mxu0
        %v1688 = vadd.f32 %v1485, %v1687
        %v1689 = vpop.f32.mrb[0].mxu0
        %1690 = vmatprep.mubr.f32.mxu0 %v1539
        %1691 = vmatmul.mubr.f32.gmra.mrb[0].mxu0 %v1455
        %v1692 = vpop.f32.mrb[0].mxu0
        %v1693 = vadd.f32 %v1485, %v1692
        %v1694 = vpop.f32.mrb[0].mxu0
        %1695 = vdwg.mxu0
        %v1696 = vmax.f32 %v1608, 0.0
        %v1697 = vmax.f32 %v1613, 0.0
        %v1698 = vmax.f32 %v1618, 0.0
        %v1699 = vmax.f32 %v1623, 0.0
        %v1700 = vmax.f32 %v1628, 0.0
        %v1701 = vmax.f32 %v1633, 0.0
        %v1702 = vmax.f32 %v1638, 0.0
        %v1703 = vmax.f32 %v1643, 0.0
        %v1704 = vmax.f32 %v1648, 0.0
        %v1705 = vmax.f32 %v1653, 0.0
        %v1706 = vmax.f32 %v1658, 0.0
        %v1707 = vmax.f32 %v1663, 0.0
        %v1708 = vmax.f32 %v1668, 0.0
        %v1709 = vmax.f32 %v1673, 0.0
        %v1710 = vmax.f32 %v1678, 0.0
        %v1711 = vmax.f32 %v1683, 0.0
        %v1712 = vmax.f32 %v1688, 0.0
        %v1713 = vmax.f32 %v1693, 0.0
        %v1714 = vmul.f32 %v1188, %v1696
        %v1715 = vmul.f32 %v1193, %v1697
        %v1716 = vmul.f32 %v1198, %v1698
        %v1717 = vmul.f32 %v1203, %v1699
        %v1718 = vmul.f32 %v1208, %v1700
        %v1719 = vmul.f32 %v1213, %v1701
        %v1720 = vmul.f32 %v1218, %v1702
        %v1721 = vmul.f32 %v1223, %v1703
        %v1722 = vmul.f32 %v1228, %v1704
        %v1723 = vmul.f32 %v1233, %v1705
        %v1724 = vmul.f32 %v1238, %v1706
        %v1725 = vmul.f32 %v1243, %v1707
        %v1726 = vmul.f32 %v1248, %v1708
        %v1727 = vmul.f32 %v1253, %v1709
        %v1728 = vmul.f32 %v1258, %v1710
        %v1729 = vmul.f32 %v1263, %v1711
        %v1730 = vmul.f32 %v1268, %v1712
        %v1731 = vmul.f32 %v1273, %v1713
        %v1732 = vrot.slane %v1714, 7
        %v1733 = vrot.slane %v1715, 7
        %v1734 = vrot.slane %v1716, 7
        %v1735 = vrot.slane %v1717, 7
        %v1736 = vrot.slane %v1718, 7
        %v1737 = vrot.slane %v1719, 7
        %v1738 = vrot.slane %v1720, 7
        %v1739 = vrot.slane %v1721, 7
        %v1740 = vrot.slane %v1722, 7
        %v1741 = vrot.slane %v1723, 7
        %v1742 = vrot.slane %v1724, 7
        %v1743 = vrot.slane %v1725, 7
        %v1744 = vrot.slane %v1726, 7
        %v1745 = vrot.slane %v1727, 7
        %v1746 = vrot.slane %v1728, 7
        %v1747 = vrot.slane %v1729, 7
        %v1748 = vrot.slane %v1730, 7
        %v1749 = vrot.slane %v1731, 7
        %v1750 = vsel %vm378, %v1748, %v1749
        %v1751 = vsel %vm378, %v1747, %v1748
        %v1752 = vsel %vm378, %v1746, %v1747
        %v1753 = vsel %vm378, %v1745, %v1746
        %v1754 = vsel %vm378, %v1744, %v1745
        %v1755 = vsel %vm378, %v1743, %v1744
        %v1756 = vsel %vm378, %v1742, %v1743
        %v1757 = vsel %vm378, %v1741, %v1742
        %v1758 = vsel %vm378, %v1740, %v1741
        %v1759 = vsel %vm378, %v1739, %v1740
        %v1760 = vsel %vm378, %v1738, %v1739
        %v1761 = vsel %vm378, %v1737, %v1738
        %v1762 = vsel %vm378, %v1736, %v1737
        %v1763 = vsel %vm378, %v1735, %v1736
        %v1764 = vsel %vm378, %v1734, %v1735
        %v1765 = vsel %vm378, %v1733, %v1734
        %v1766 = vsel %vm378, %v1732, %v1733
        %v1767 = vsel %vm378, %v1749, %v1732
        %v1768 = vrot.slane %v1714, 1
        %v1769 = vrot.slane %v1715, 1
        %v1770 = vrot.slane %v1716, 1
        %v1771 = vrot.slane %v1717, 1
        %v1772 = vrot.slane %v1718, 1
        %v1773 = vrot.slane %v1719, 1
        %v1774 = vrot.slane %v1720, 1
        %v1775 = vrot.slane %v1721, 1
        %v1776 = vrot.slane %v1722, 1
        %v1777 = vrot.slane %v1723, 1
        %v1778 = vrot.slane %v1724, 1
        %v1779 = vrot.slane %v1725, 1
        %v1780 = vrot.slane %v1726, 1
        %v1781 = vrot.slane %v1727, 1
        %v1782 = vrot.slane %v1728, 1
        %v1783 = vrot.slane %v1729, 1
        %v1784 = vrot.slane %v1730, 1
        %v1785 = vrot.slane %v1731, 1
        %v1786 = vsel %vm415, %v1784, %v1785
        %v1787 = vsel %vm415, %v1783, %v1784
        %v1788 = vsel %vm415, %v1782, %v1783
        %v1789 = vsel %vm415, %v1781, %v1782
        %v1790 = vsel %vm415, %v1780, %v1781
        %v1791 = vsel %vm415, %v1779, %v1780
        %v1792 = vsel %vm415, %v1778, %v1779
        %v1793 = vsel %vm415, %v1777, %v1778
        %v1794 = vsel %vm415, %v1776, %v1777
        %v1795 = vsel %vm415, %v1775, %v1776
        %v1796 = vsel %vm415, %v1774, %v1775
        %v1797 = vsel %vm415, %v1773, %v1774
        %v1798 = vsel %vm415, %v1772, %v1773
        %v1799 = vsel %vm415, %v1771, %v1772
        %v1800 = vsel %vm415, %v1770, %v1771
        %v1801 = vsel %vm415, %v1769, %v1770
        %v1802 = vsel %vm415, %v1768, %v1769
        %v1803 = vsel %vm415, %v1785, %v1768
        %v1804 = vld [vmem:[#allocation2] sm:$0xff]
        %v1805 = vld [vmem:[#allocation2 + $0x8] sm:$0xff]
        %v1806 = vld [vmem:[#allocation2 + $0x10] sm:$0xff]
        %v1807 = vld [vmem:[#allocation2 + $0x18] sm:$0xff]
        %v1808 = vld [vmem:[#allocation2 + $0x20] sm:$0xff]
        %v1809 = vld [vmem:[#allocation2 + $0x28] sm:$0xff]
        %v1810 = vld [vmem:[#allocation2 + $0x30] sm:$0xff]
        %v1811 = vld [vmem:[#allocation2 + $0x38] sm:$0xff]
        %v1812 = vld [vmem:[#allocation2 + $0x40] sm:$0xff]
        %v1813 = vld [vmem:[#allocation2 + $0x48] sm:$0xff]
        %v1814 = vld [vmem:[#allocation2 + $0x50] sm:$0xff]
        %v1815 = vld [vmem:[#allocation2 + $0x58] sm:$0xff]
        %v1816 = vld [vmem:[#allocation2 + $0x60] sm:$0xff]
        %v1817 = vld [vmem:[#allocation2 + $0x68] sm:$0xff]
        %v1818 = vld [vmem:[#allocation2 + $0x70] sm:$0xff]
        %v1819 = vld [vmem:[#allocation2 + $0x78] sm:$0xff]
        %v1820 = vld [vmem:[#allocation2 + $0x80] sm:$0xff]
        %v1821 = vld [vmem:[#allocation2 + $0x88] sm:$0xff]
        %v1822 = vld [vmem:[#allocation2 + $0x90] sm:$0xff]
        %v1823 = vld [vmem:[#allocation2 + $0x98] sm:$0xff]
        %v1824 = vld [vmem:[#allocation2 + $0xa0] sm:$0xff]
        %v1825 = vld [vmem:[#allocation2 + $0xa8] sm:$0xff]
        %v1826 = vld [vmem:[#allocation2 + $0xb0] sm:$0xff]
        %v1827 = vld [vmem:[#allocation2 + $0xb8] sm:$0xff]
        %v1828 = vld [vmem:[#allocation2 + $0xc0] sm:$0xff]
        %v1829 = vld [vmem:[#allocation2 + $0xc8] sm:$0xff]
        %v1830 = vld [vmem:[#allocation2 + $0xd0] sm:$0xff]
        %v1831 = vld [vmem:[#allocation2 + $0xd8] sm:$0xff]
        %v1832 = vld [vmem:[#allocation2 + $0xe0] sm:$0xff]
        %v1833 = vld [vmem:[#allocation2 + $0xe8] sm:$0xff]
        %v1834 = vld [vmem:[#allocation2 + $0xf0] sm:$0xff]
        %v1835 = vld [vmem:[#allocation2 + $0xf8] sm:$0xff]
        %v1836 = vld [vmem:[#allocation2 + $0x100] sm:$0xff]
        %v1837 = vld [vmem:[#allocation2 + $0x108] sm:$0xff]
        %v1838 = vld [vmem:[#allocation2 + $0x110] sm:$0xff]
        %v1839 = vld [vmem:[#allocation2 + $0x118] sm:$0xff]
        %v1840 = vld [vmem:[#allocation2 + $0x120] sm:$0xff]
        %v1841 = vld [vmem:[#allocation2 + $0x128] sm:$0xff]
        %v1842 = vld [vmem:[#allocation2 + $0x130] sm:$0xff]
        %v1843 = vld [vmem:[#allocation2 + $0x138] sm:$0xff]
        %v1844 = vld [vmem:[#allocation2 + $0x140] sm:$0xff]
        %v1845 = vld [vmem:[#allocation2 + $0x148] sm:$0xff]
        %v1846 = vld [vmem:[#allocation2 + $0x150] sm:$0xff]
        %v1847 = vld [vmem:[#allocation2 + $0x158] sm:$0xff]
        %v1848 = vld [vmem:[#allocation2 + $0x160] sm:$0xff]
        %v1849 = vld [vmem:[#allocation2 + $0x168] sm:$0xff]
        %v1850 = vld [vmem:[#allocation2 + $0x170] sm:$0xff]
        %v1851 = vld [vmem:[#allocation2 + $0x178] sm:$0xff]
        %v1852 = vld [vmem:[#allocation2 + $0x180] sm:$0xff]
        %v1853 = vld [vmem:[#allocation2 + $0x188] sm:$0xff]
        %v1854 = vld [vmem:[#allocation2 + $0x190] sm:$0xff]
        %v1855 = vld [vmem:[#allocation2 + $0x198] sm:$0xff]
        %v1856 = vld [vmem:[#allocation2 + $0x1a0] sm:$0xff]
        %v1857 = vld [vmem:[#allocation2 + $0x1a8] sm:$0xff]
        %v1858 = vld [vmem:[#allocation2 + $0x1b0] sm:$0xff]
        %v1859 = vld [vmem:[#allocation2 + $0x1b8] sm:$0xff]
        %v1860 = vld [vmem:[#allocation2 + $0x1c0] sm:$0xff]
        %v1861 = vld [vmem:[#allocation2 + $0x1c8] sm:$0xff]
        %v1862 = vld [vmem:[#allocation2 + $0x1d0] sm:$0xff]
        %v1863 = vld [vmem:[#allocation2 + $0x1d8] sm:$0xff]
        %v1864 = vld [vmem:[#allocation2 + $0x1e0] sm:$0xff]
        %v1865 = vld [vmem:[#allocation2 + $0x1e8] sm:$0xff]
        %v1866 = vld [vmem:[#allocation2 + $0x1f0] sm:$0xff]
        %v1867 = vld [vmem:[#allocation2 + $0x1f8] sm:$0xff]
        %1868 = vmatprep.subr.mxu0 %v1837
        %1869 = vmatpush1.msra.mxu0 %v1836
        %1870 = vmatprep.subr.mxu0 %v1839
        %1871 = vmatpush1.msra.mxu0 %v1838
        %1872 = vmatprep.subr.mxu0 %v1841
        %1873 = vmatpush1.msra.mxu0 %v1840
        %1874 = vmatprep.subr.mxu0 %v1843
        %1875 = vmatpush1.msra.mxu0 %v1842
        %1876 = vmatprep.subr.mxu0 %v1845
        %1877 = vmatpush1.msra.mxu0 %v1844
        %1878 = vmatprep.subr.mxu0 %v1847
        %1879 = vmatpush1.msra.mxu0 %v1846
        %1880 = vmatprep.subr.mxu0 %v1849
        %1881 = vmatpush1.msra.mxu0 %v1848
        %1882 = vmatprep.subr.mxu0 %v1851
        %1883 = vmatpush1.msra.mxu0 %v1850
        %1884 = vmatprep.subr.mxu0 %v1853
        %1885 = vmatpush1.msra.mxu0 %v1852
        %1886 = vmatprep.subr.mxu0 %v1855
        %1887 = vmatpush1.msra.mxu0 %v1854
        %1888 = vmatprep.subr.mxu0 %v1857
        %1889 = vmatpush1.msra.mxu0 %v1856
        %1890 = vmatprep.subr.mxu0 %v1859
        %1891 = vmatpush1.msra.mxu0 %v1858
        %1892 = vmatprep.subr.mxu0 %v1861
        %1893 = vmatpush1.msra.mxu0 %v1860
        %1894 = vmatprep.subr.mxu0 %v1863
        %1895 = vmatpush1.msra.mxu0 %v1862
        %1896 = vmatprep.subr.mxu0 %v1865
        %1897 = vmatpush1.msra.mxu0 %v1864
        %1898 = vmatprep.subr.mxu0 %v1867
        %1899 = vmatpush1.msra.mxu0 %v1866
        %1900 = vmatprep.subr.mxu0 0.0
        %1901 = vmatpush1.msra.mxu0 0.0
        %1902 = vmatprep.subr.mxu0 0.0
        %1903 = vmatpush1.msra.mxu0 0.0
        %1904 = vmatprep.subr.mxu0 0.0
        %1905 = vmatpush1.msra.mxu0 0.0
        %1906 = vmatprep.subr.mxu0 0.0
        %1907 = vmatpush1.msra.mxu0 0.0
        %1908 = vmatprep.subr.mxu0 0.0
        %1909 = vmatpush1.msra.mxu0 0.0
        %1910 = vmatprep.subr.mxu0 0.0
        %1911 = vmatpush1.msra.mxu0 0.0
        %1912 = vmatprep.subr.mxu0 0.0
        %1913 = vmatpush1.msra.mxu0 0.0
        %1914 = vmatprep.subr.mxu0 0.0
        %1915 = vmatpush1.msra.mxu0 0.0
        %1916 = vmatprep.subr.mxu0 0.0
        %1917 = vmatpush1.msra.mxu0 0.0
        %1918 = vmatprep.subr.mxu0 0.0
        %1919 = vmatpush1.msra.mxu0 0.0
        %1920 = vmatprep.subr.mxu0 0.0
        %1921 = vmatpush1.msra.mxu0 0.0
        %1922 = vmatprep.subr.mxu0 0.0
        %1923 = vmatpush1.msra.mxu0 0.0
        %1924 = vmatprep.subr.mxu0 0.0
        %1925 = vmatpush1.msra.mxu0 0.0
        %1926 = vmatprep.subr.mxu0 0.0
        %1927 = vmatpush1.msra.mxu0 0.0
        %1928 = vmatprep.subr.mxu0 0.0
        %1929 = vmatpush1.msra.mxu0 0.0
        %1930 = vmatprep.subr.mxu0 0.0
        %1931 = vmatpush1.msra.mxu0 0.0
        %1932 = vmatprep.mubr.f32.mxu0 0.0
        %1933 = vmatmul.mubr.f32.gmra.mrb[0].mxu0 %v1714
        %v1934 = vpop.f32.mrb[0].mxu0
        %v1935 = vadd.f32 0.0, %v1934
        %v1936 = vpop.f32.mrb[0].mxu0
        %v1937 = vadd.f32 0.0, %v1936
        %1938 = vmatprep.mubr.f32.mxu0 0.0
        %1939 = vmatmul.mubr.f32.gmra.mrb[0].mxu0 %v1715
        %v1940 = vpop.f32.mrb[0].mxu0
        %v1941 = vadd.f32 0.0, %v1940
        %v1942 = vpop.f32.mrb[0].mxu0
        %v1943 = vadd.f32 0.0, %v1942
        %1944 = vmatprep.mubr.f32.mxu0 0.0
        %1945 = vmatmul.mubr.f32.gmra.mrb[0].mxu0 %v1716
        %v1946 = vpop.f32.mrb[0].mxu0
        %v1947 = vadd.f32 0.0, %v1946
        %v1948 = vpop.f32.mrb[0].mxu0
        %v1949 = vadd.f32 0.0, %v1948
        %1950 = vmatprep.mubr.f32.mxu0 0.0
        %1951 = vmatmul.mubr.f32.gmra.mrb[0].mxu0 %v1717
        %v1952 = vpop.f32.mrb[0].mxu0
        %v1953 = vadd.f32 0.0, %v1952
        %v1954 = vpop.f32.mrb[0].mxu0
        %v1955 = vadd.f32 0.0, %v1954
        %1956 = vmatprep.mubr.f32.mxu0 0.0
        %1957 = vmatmul.mubr.f32.gmra.mrb[0].mxu0 %v1718
        %v1958 = vpop.f32.mrb[0].mxu0
        %v1959 = vadd.f32 0.0, %v1958
        %v1960 = vpop.f32.mrb[0].mxu0
        %v1961 = vadd.f32 0.0, %v1960
        %1962 = vmatprep.mubr.f32.mxu0 0.0
        %1963 = vmatmul.mubr.f32.gmra.mrb[0].mxu0 %v1719
        %v1964 = vpop.f32.mrb[0].mxu0
        %v1965 = vadd.f32 0.0, %v1964
        %v1966 = vpop.f32.mrb[0].mxu0
        %v1967 = vadd.f32 0.0, %v1966
        %1968 = vmatprep.mubr.f32.mxu0 0.0
        %1969 = vmatmul.mubr.f32.gmra.mrb[0].mxu0 %v1720
        %v1970 = vpop.f32.mrb[0].mxu0
        %v1971 = vadd.f32 0.0, %v1970
        %v1972 = vpop.f32.mrb[0].mxu0
        %v1973 = vadd.f32 0.0, %v1972
        %1974 = vmatprep.mubr.f32.mxu0 0.0
        %1975 = vmatmul.mubr.f32.gmra.mrb[0].mxu0 %v1721
        %v1976 = vpop.f32.mrb[0].mxu0
        %v1977 = vadd.f32 0.0, %v1976
        %v1978 = vpop.f32.mrb[0].mxu0
        %v1979 = vadd.f32 0.0, %v1978
        %1980 = vmatprep.mubr.f32.mxu0 0.0
        %1981 = vmatmul.mubr.f32.gmra.mrb[0].mxu0 %v1722
        %v1982 = vpop.f32.mrb[0].mxu0
        %v1983 = vadd.f32 0.0, %v1982
        %v1984 = vpop.f32.mrb[0].mxu0
        %v1985 = vadd.f32 0.0, %v1984
        %1986 = vmatprep.mubr.f32.mxu0 0.0
        %1987 = vmatmul.mubr.f32.gmra.mrb[0].mxu0 %v1723
        %v1988 = vpop.f32.mrb[0].mxu0
        %v1989 = vadd.f32 0.0, %v1988
        %v1990 = vpop.f32.mrb[0].mxu0
        %v1991 = vadd.f32 0.0, %v1990
        %1992 = vmatprep.mubr.f32.mxu0 0.0
        %1993 = vmatmul.mubr.f32.gmra.mrb[0].mxu0 %v1724
        %v1994 = vpop.f32.mrb[0].mxu0
        %v1995 = vadd.f32 0.0, %v1994
        %v1996 = vpop.f32.mrb[0].mxu0
        %v1997 = vadd.f32 0.0, %v1996
        %1998 = vmatprep.mubr.f32.mxu0 0.0
        %1999 = vmatmul.mubr.f32.gmra.mrb[0].mxu0 %v1725
        %v2000 = vpop.f32.mrb[0].mxu0
        %v2001 = vadd.f32 0.0, %v2000
        %v2002 = vpop.f32.mrb[0].mxu0
        %v2003 = vadd.f32 0.0, %v2002
        %2004 = vmatprep.mubr.f32.mxu0 0.0
        %2005 = vmatmul.mubr.f32.gmra.mrb[0].mxu0 %v1726
        %v2006 = vpop.f32.mrb[0].mxu0
        %v2007 = vadd.f32 0.0, %v2006
        %v2008 = vpop.f32.mrb[0].mxu0
        %v2009 = vadd.f32 0.0, %v2008
        %2010 = vmatprep.mubr.f32.mxu0 0.0
        %2011 = vmatmul.mubr.f32.gmra.mrb[0].mxu0 %v1727
        %v2012 = vpop.f32.mrb[0].mxu0
        %v2013 = vadd.f32 0.0, %v2012
        %v2014 = vpop.f32.mrb[0].mxu0
        %v2015 = vadd.f32 0.0, %v2014
        %2016 = vmatprep.mubr.f32.mxu0 0.0
        %2017 = vmatmul.mubr.f32.gmra.mrb[0].mxu0 %v1728
        %v2018 = vpop.f32.mrb[0].mxu0
        %v2019 = vadd.f32 0.0, %v2018
        %v2020 = vpop.f32.mrb[0].mxu0
        %v2021 = vadd.f32 0.0, %v2020
        %2022 = vmatprep.mubr.f32.mxu0 0.0
        %2023 = vmatmul.mubr.f32.gmra.mrb[0].mxu0 %v1729
        %v2024 = vpop.f32.mrb[0].mxu0
        %v2025 = vadd.f32 0.0, %v2024
        %v2026 = vpop.f32.mrb[0].mxu0
        %v2027 = vadd.f32 0.0, %v2026
        %2028 = vmatprep.mubr.f32.mxu0 0.0
        %2029 = vmatmul.mubr.f32.gmra.mrb[0].mxu0 %v1730
        %v2030 = vpop.f32.mrb[0].mxu0
        %v2031 = vadd.f32 0.0, %v2030
        %v2032 = vpop.f32.mrb[0].mxu0
        %v2033 = vadd.f32 0.0, %v2032
        %2034 = vmatprep.mubr.f32.mxu0 0.0
        %2035 = vmatmul.mubr.f32.gmra.mrb[0].mxu0 %v1731
        %v2036 = vpop.f32.mrb[0].mxu0
        %v2037 = vadd.f32 0.0, %v2036
        %v2038 = vpop.f32.mrb[0].mxu0
        %v2039 = vadd.f32 0.0, %v2038
        %2040 = vdwg.mxu0
        %2041 = vmatprep.subr.mxu0 %v1805
        %2042 = vmatpush1.msra.mxu0 %v1804
        %2043 = vmatprep.subr.mxu0 %v1807
        %2044 = vmatpush1.msra.mxu0 %v1806
        %2045 = vmatprep.subr.mxu0 %v1809
        %2046 = vmatpush1.msra.mxu0 %v1808
        %2047 = vmatprep.subr.mxu0 %v1811
        %2048 = vmatpush1.msra.mxu0 %v1810
        %2049 = vmatprep.subr.mxu0 %v1813
        %2050 = vmatpush1.msra.mxu0 %v1812
        %2051 = vmatprep.subr.mxu0 %v1815
        %2052 = vmatpush1.msra.mxu0 %v1814
        %2053 = vmatprep.subr.mxu0 %v1817
        %2054 = vmatpush1.msra.mxu0 %v1816
        %2055 = vmatprep.subr.mxu0 %v1819
        %2056 = vmatpush1.msra.mxu0 %v1818
        %2057 = vmatprep.subr.mxu0 %v1821
        %2058 = vmatpush1.msra.mxu0 %v1820
        %2059 = vmatprep.subr.mxu0 %v1823
        %2060 = vmatpush1.msra.mxu0 %v1822
        %2061 = vmatprep.subr.mxu0 %v1825
        %2062 = vmatpush1.msra.mxu0 %v1824
        %2063 = vmatprep.subr.mxu0 %v1827
        %2064 = vmatpush1.msra.mxu0 %v1826
        %2065 = vmatprep.subr.mxu0 %v1829
        %2066 = vmatpush1.msra.mxu0 %v1828
        %2067 = vmatprep.subr.mxu0 %v1831
        %2068 = vmatpush1.msra.mxu0 %v1830
        %2069 = vmatprep.subr.mxu0 %v1833
        %2070 = vmatpush1.msra.mxu0 %v1832
        %2071 = vmatprep.subr.mxu0 %v1835
        %2072 = vmatpush1.msra.mxu0 %v1834
        %2073 = vmatprep.subr.mxu0 0.0
        %2074 = vmatpush1.msra.mxu0 0.0
        %2075 = vmatprep.subr.mxu0 0.0
        %2076 = vmatpush1.msra.mxu0 0.0
        %2077 = vmatprep.subr.mxu0 0.0
        %2078 = vmatpush1.msra.mxu0 0.0
        %2079 = vmatprep.subr.mxu0 0.0
        %2080 = vmatpush1.msra.mxu0 0.0
        %2081 = vmatprep.subr.mxu0 0.0
        %2082 = vmatpush1.msra.mxu0 0.0
        %2083 = vmatprep.subr.mxu0 0.0
        %2084 = vmatpush1.msra.mxu0 0.0
        %2085 = vmatprep.subr.mxu0 0.0
        %2086 = vmatpush1.msra.mxu0 0.0
        %2087 = vmatprep.subr.mxu0 0.0
        %2088 = vmatpush1.msra.mxu0 0.0
        %2089 = vmatprep.subr.mxu0 0.0
        %2090 = vmatpush1.msra.mxu0 0.0
        %2091 = vmatprep.subr.mxu0 0.0
        %2092 = vmatpush1.msra.mxu0 0.0
        %2093 = vmatprep.subr.mxu0 0.0
        %2094 = vmatpush1.msra.mxu0 0.0
        %2095 = vmatprep.subr.mxu0 0.0
        %2096 = vmatpush1.msra.mxu0 0.0
        %2097 = vmatprep.subr.mxu0 0.0
        %2098 = vmatpush1.msra.mxu0 0.0
        %2099 = vmatprep.subr.mxu0 0.0
        %2100 = vmatpush1.msra.mxu0 0.0
        %2101 = vmatprep.subr.mxu0 0.0
        %2102 = vmatpush1.msra.mxu0 0.0
        %2103 = vmatprep.subr.mxu0 0.0
        %2104 = vmatpush1.msra.mxu0 0.0
        %2105 = vmatprep.mubr.f32.mxu0 0.0
        %2106 = vmatmul.mubr.f32.gmra.mrb[0].mxu0 %v1767
        %v2107 = vpop.f32.mrb[0].mxu0
        %v2108 = vadd.f32 %v1935, %v2107
        %v2109 = vpop.f32.mrb[0].mxu0
        %v2110 = vadd.f32 %v1937, %v2109
        %2111 = vmatprep.mubr.f32.mxu0 0.0
        %2112 = vmatmul.mubr.f32.gmra.mrb[0].mxu0 %v1766
        %v2113 = vpop.f32.mrb[0].mxu0
        %v2114 = vadd.f32 %v1941, %v2113
        %v2115 = vpop.f32.mrb[0].mxu0
        %v2116 = vadd.f32 %v1943, %v2115
        %2117 = vmatprep.mubr.f32.mxu0 0.0
        %2118 = vmatmul.mubr.f32.gmra.mrb[0].mxu0 %v1765
        %v2119 = vpop.f32.mrb[0].mxu0
        %v2120 = vadd.f32 %v1947, %v2119
        %v2121 = vpop.f32.mrb[0].mxu0
        %v2122 = vadd.f32 %v1949, %v2121
        %2123 = vmatprep.mubr.f32.mxu0 0.0
        %2124 = vmatmul.mubr.f32.gmra.mrb[0].mxu0 %v1764
        %v2125 = vpop.f32.mrb[0].mxu0
        %v2126 = vadd.f32 %v1953, %v2125
        %v2127 = vpop.f32.mrb[0].mxu0
        %v2128 = vadd.f32 %v1955, %v2127
        %2129 = vmatprep.mubr.f32.mxu0 0.0
        %2130 = vmatmul.mubr.f32.gmra.mrb[0].mxu0 %v1763
        %v2131 = vpop.f32.mrb[0].mxu0
        %v2132 = vadd.f32 %v1959, %v2131
        %v2133 = vpop.f32.mrb[0].mxu0
        %v2134 = vadd.f32 %v1961, %v2133
        %2135 = vmatprep.mubr.f32.mxu0 0.0
        %2136 = vmatmul.mubr.f32.gmra.mrb[0].mxu0 %v1762
        %v2137 = vpop.f32.mrb[0].mxu0
        %v2138 = vadd.f32 %v1965, %v2137
        %v2139 = vpop.f32.mrb[0].mxu0
        %v2140 = vadd.f32 %v1967, %v2139
        %2141 = vmatprep.mubr.f32.mxu0 0.0
        %2142 = vmatmul.mubr.f32.gmra.mrb[0].mxu0 %v1761
        %v2143 = vpop.f32.mrb[0].mxu0
        %v2144 = vadd.f32 %v1971, %v2143
        %v2145 = vpop.f32.mrb[0].mxu0
        %v2146 = vadd.f32 %v1973, %v2145
        %2147 = vmatprep.mubr.f32.mxu0 0.0
        %2148 = vmatmul.mubr.f32.gmra.mrb[0].mxu0 %v1760
        %v2149 = vpop.f32.mrb[0].mxu0
        %v2150 = vadd.f32 %v1977, %v2149
        %v2151 = vpop.f32.mrb[0].mxu0
        %v2152 = vadd.f32 %v1979, %v2151
        %2153 = vmatprep.mubr.f32.mxu0 0.0
        %2154 = vmatmul.mubr.f32.gmra.mrb[0].mxu0 %v1759
        %v2155 = vpop.f32.mrb[0].mxu0
        %v2156 = vadd.f32 %v1983, %v2155
        %v2157 = vpop.f32.mrb[0].mxu0
        %v2158 = vadd.f32 %v1985, %v2157
        %2159 = vmatprep.mubr.f32.mxu0 0.0
        %2160 = vmatmul.mubr.f32.gmra.mrb[0].mxu0 %v1758
        %v2161 = vpop.f32.mrb[0].mxu0
        %v2162 = vadd.f32 %v1989, %v2161
        %v2163 = vpop.f32.mrb[0].mxu0
        %v2164 = vadd.f32 %v1991, %v2163
        %2165 = vmatprep.mubr.f32.mxu0 0.0
        %2166 = vmatmul.mubr.f32.gmra.mrb[0].mxu0 %v1757
        %v2167 = vpop.f32.mrb[0].mxu0
        %v2168 = vadd.f32 %v1995, %v2167
        %v2169 = vpop.f32.mrb[0].mxu0
        %v2170 = vadd.f32 %v1997, %v2169
        %2171 = vmatprep.mubr.f32.mxu0 0.0
        %2172 = vmatmul.mubr.f32.gmra.mrb[0].mxu0 %v1756
        %v2173 = vpop.f32.mrb[0].mxu0
        %v2174 = vadd.f32 %v2001, %v2173
        %v2175 = vpop.f32.mrb[0].mxu0
        %v2176 = vadd.f32 %v2003, %v2175
        %2177 = vmatprep.mubr.f32.mxu0 0.0
        %2178 = vmatmul.mubr.f32.gmra.mrb[0].mxu0 %v1755
        %v2179 = vpop.f32.mrb[0].mxu0
        %v2180 = vadd.f32 %v2007, %v2179
        %v2181 = vpop.f32.mrb[0].mxu0
        %v2182 = vadd.f32 %v2009, %v2181
        %2183 = vmatprep.mubr.f32.mxu0 0.0
        %2184 = vmatmul.mubr.f32.gmra.mrb[0].mxu0 %v1754
        %v2185 = vpop.f32.mrb[0].mxu0
        %v2186 = vadd.f32 %v2013, %v2185
        %v2187 = vpop.f32.mrb[0].mxu0
        %v2188 = vadd.f32 %v2015, %v2187
        %2189 = vmatprep.mubr.f32.mxu0 0.0
        %2190 = vmatmul.mubr.f32.gmra.mrb[0].mxu0 %v1753
        %v2191 = vpop.f32.mrb[0].mxu0
        %v2192 = vadd.f32 %v2019, %v2191
        %v2193 = vpop.f32.mrb[0].mxu0
        %v2194 = vadd.f32 %v2021, %v2193
        %2195 = vmatprep.mubr.f32.mxu0 0.0
        %2196 = vmatmul.mubr.f32.gmra.mrb[0].mxu0 %v1752
        %v2197 = vpop.f32.mrb[0].mxu0
        %v2198 = vadd.f32 %v2025, %v2197
        %v2199 = vpop.f32.mrb[0].mxu0
        %v2200 = vadd.f32 %v2027, %v2199
        %2201 = vmatprep.mubr.f32.mxu0 0.0
        %2202 = vmatmul.mubr.f32.gmra.mrb[0].mxu0 %v1751
        %v2203 = vpop.f32.mrb[0].mxu0
        %v2204 = vadd.f32 %v2031, %v2203
        %v2205 = vpop.f32.mrb[0].mxu0
        %v2206 = vadd.f32 %v2033, %v2205
        %2207 = vmatprep.mubr.f32.mxu0 0.0
        %2208 = vmatmul.mubr.f32.gmra.mrb[0].mxu0 %v1750
        %v2209 = vpop.f32.mrb[0].mxu0
        %v2210 = vadd.f32 %v2037, %v2209
        %v2211 = vpop.f32.mrb[0].mxu0
        %v2212 = vadd.f32 %v2039, %v2211
        %2213 = vdwg.mxu0
        %v2214 = vld [vmem:[#allocation2 + $0x200] sm:$0xff]
        %v2215 = vld [vmem:[#allocation2 + $0x208] sm:$0xff]
        %v2216 = vld [vmem:[#allocation2 + $0x210] sm:$0xff]
        %v2217 = vld [vmem:[#allocation2 + $0x218] sm:$0xff]
        %v2218 = vld [vmem:[#allocation2 + $0x220] sm:$0xff]
        %v2219 = vld [vmem:[#allocation2 + $0x228] sm:$0xff]
        %v2220 = vld [vmem:[#allocation2 + $0x230] sm:$0xff]
        %v2221 = vld [vmem:[#allocation2 + $0x238] sm:$0xff]
        %v2222 = vld [vmem:[#allocation2 + $0x240] sm:$0xff]
        %v2223 = vld [vmem:[#allocation2 + $0x248] sm:$0xff]
        %v2224 = vld [vmem:[#allocation2 + $0x250] sm:$0xff]
        %v2225 = vld [vmem:[#allocation2 + $0x258] sm:$0xff]
        %v2226 = vld [vmem:[#allocation2 + $0x260] sm:$0xff]
        %v2227 = vld [vmem:[#allocation2 + $0x268] sm:$0xff]
        %v2228 = vld [vmem:[#allocation2 + $0x270] sm:$0xff]
        %v2229 = vld [vmem:[#allocation2 + $0x278] sm:$0xff]
        %v2230 = vld [vmem:[#allocation2 + $0x280] sm:$0xff]
        %v2231 = vld [vmem:[#allocation2 + $0x288] sm:$0xff]
        %v2232 = vld [vmem:[#allocation2 + $0x290] sm:$0xff]
        %v2233 = vld [vmem:[#allocation2 + $0x298] sm:$0xff]
        %v2234 = vld [vmem:[#allocation2 + $0x2a0] sm:$0xff]
        %v2235 = vld [vmem:[#allocation2 + $0x2a8] sm:$0xff]
        %v2236 = vld [vmem:[#allocation2 + $0x2b0] sm:$0xff]
        %v2237 = vld [vmem:[#allocation2 + $0x2b8] sm:$0xff]
        %v2238 = vld [vmem:[#allocation2 + $0x2c0] sm:$0xff]
        %v2239 = vld [vmem:[#allocation2 + $0x2c8] sm:$0xff]
        %v2240 = vld [vmem:[#allocation2 + $0x2d0] sm:$0xff]
        %v2241 = vld [vmem:[#allocation2 + $0x2d8] sm:$0xff]
        %v2242 = vld [vmem:[#allocation2 + $0x2e0] sm:$0xff]
        %v2243 = vld [vmem:[#allocation2 + $0x2e8] sm:$0xff]
        %v2244 = vld [vmem:[#allocation2 + $0x2f0] sm:$0xff]
        %v2245 = vld [vmem:[#allocation2 + $0x2f8] sm:$0xff]
        %2246 = vmatprep.subr.mxu0 %v2215
        %2247 = vmatpush1.msra.mxu0 %v2214
        %2248 = vmatprep.subr.mxu0 %v2217
        %2249 = vmatpush1.msra.mxu0 %v2216
        %2250 = vmatprep.subr.mxu0 %v2219
        %2251 = vmatpush1.msra.mxu0 %v2218
        %2252 = vmatprep.subr.mxu0 %v2221
        %2253 = vmatpush1.msra.mxu0 %v2220
        %2254 = vmatprep.subr.mxu0 %v2223
        %2255 = vmatpush1.msra.mxu0 %v2222
        %2256 = vmatprep.subr.mxu0 %v2225
        %2257 = vmatpush1.msra.mxu0 %v2224
        %2258 = vmatprep.subr.mxu0 %v2227
        %2259 = vmatpush1.msra.mxu0 %v2226
        %2260 = vmatprep.subr.mxu0 %v2229
        %2261 = vmatpush1.msra.mxu0 %v2228
        %2262 = vmatprep.subr.mxu0 %v2231
        %2263 = vmatpush1.msra.mxu0 %v2230
        %2264 = vmatprep.subr.mxu0 %v2233
        %2265 = vmatpush1.msra.mxu0 %v2232
        %2266 = vmatprep.subr.mxu0 %v2235
        %2267 = vmatpush1.msra.mxu0 %v2234
        %2268 = vmatprep.subr.mxu0 %v2237
        %2269 = vmatpush1.msra.mxu0 %v2236
        %2270 = vmatprep.subr.mxu0 %v2239
        %2271 = vmatpush1.msra.mxu0 %v2238
        %2272 = vmatprep.subr.mxu0 %v2241
        %2273 = vmatpush1.msra.mxu0 %v2240
        %2274 = vmatprep.subr.mxu0 %v2243
        %2275 = vmatpush1.msra.mxu0 %v2242
        %2276 = vmatprep.subr.mxu0 %v2245
        %2277 = vmatpush1.msra.mxu0 %v2244
        %2278 = vmatprep.subr.mxu0 0.0
        %2279 = vmatpush1.msra.mxu0 0.0
        %2280 = vmatprep.subr.mxu0 0.0
        %2281 = vmatpush1.msra.mxu0 0.0
        %2282 = vmatprep.subr.mxu0 0.0
        %2283 = vmatpush1.msra.mxu0 0.0
        %2284 = vmatprep.subr.mxu0 0.0
        %2285 = vmatpush1.msra.mxu0 0.0
        %2286 = vmatprep.subr.mxu0 0.0
        %2287 = vmatpush1.msra.mxu0 0.0
        %2288 = vmatprep.subr.mxu0 0.0
        %2289 = vmatpush1.msra.mxu0 0.0
        %2290 = vmatprep.subr.mxu0 0.0
        %2291 = vmatpush1.msra.mxu0 0.0
        %2292 = vmatprep.subr.mxu0 0.0
        %2293 = vmatpush1.msra.mxu0 0.0
        %2294 = vmatprep.subr.mxu0 0.0
        %2295 = vmatpush1.msra.mxu0 0.0
        %2296 = vmatprep.subr.mxu0 0.0
        %2297 = vmatpush1.msra.mxu0 0.0
        %2298 = vmatprep.subr.mxu0 0.0
        %2299 = vmatpush1.msra.mxu0 0.0
        %2300 = vmatprep.subr.mxu0 0.0
        %2301 = vmatpush1.msra.mxu0 0.0
        %2302 = vmatprep.subr.mxu0 0.0
        %2303 = vmatpush1.msra.mxu0 0.0
        %2304 = vmatprep.subr.mxu0 0.0
        %2305 = vmatpush1.msra.mxu0 0.0
        %2306 = vmatprep.subr.mxu0 0.0
        %2307 = vmatpush1.msra.mxu0 0.0
        %2308 = vmatprep.subr.mxu0 0.0
        %2309 = vmatpush1.msra.mxu0 0.0
        %2310 = vmatprep.mubr.f32.mxu0 0.0
        %2311 = vmatmul.mubr.f32.gmra.mrb[0].mxu0 %v1802
        %v2312 = vpop.f32.mrb[0].mxu0
        %v2313 = vadd.f32 0.0, %v2312
        %v2314 = vpop.f32.mrb[0].mxu0
        %v2315 = vadd.f32 0.0, %v2314
        %2316 = vmatprep.mubr.f32.mxu0 0.0
        %2317 = vmatmul.mubr.f32.gmra.mrb[0].mxu0 %v1801
        %v2318 = vpop.f32.mrb[0].mxu0
        %v2319 = vadd.f32 0.0, %v2318
        %v2320 = vpop.f32.mrb[0].mxu0
        %v2321 = vadd.f32 0.0, %v2320
        %2322 = vmatprep.mubr.f32.mxu0 0.0
        %2323 = vmatmul.mubr.f32.gmra.mrb[0].mxu0 %v1800
        %v2324 = vpop.f32.mrb[0].mxu0
        %v2325 = vadd.f32 0.0, %v2324
        %v2326 = vpop.f32.mrb[0].mxu0
        %v2327 = vadd.f32 0.0, %v2326
        %2328 = vmatprep.mubr.f32.mxu0 0.0
        %2329 = vmatmul.mubr.f32.gmra.mrb[0].mxu0 %v1799
        %v2330 = vpop.f32.mrb[0].mxu0
        %v2331 = vadd.f32 0.0, %v2330
        %v2332 = vpop.f32.mrb[0].mxu0
        %v2333 = vadd.f32 0.0, %v2332
        %2334 = vmatprep.mubr.f32.mxu0 0.0
        %2335 = vmatmul.mubr.f32.gmra.mrb[0].mxu0 %v1798
        %v2336 = vpop.f32.mrb[0].mxu0
        %v2337 = vadd.f32 0.0, %v2336
        %v2338 = vpop.f32.mrb[0].mxu0
        %v2339 = vadd.f32 0.0, %v2338
        %2340 = vmatprep.mubr.f32.mxu0 0.0
        %2341 = vmatmul.mubr.f32.gmra.mrb[0].mxu0 %v1797
        %v2342 = vpop.f32.mrb[0].mxu0
        %v2343 = vadd.f32 0.0, %v2342
        %v2344 = vpop.f32.mrb[0].mxu0
        %v2345 = vadd.f32 0.0, %v2344
        %2346 = vmatprep.mubr.f32.mxu0 0.0
        %2347 = vmatmul.mubr.f32.gmra.mrb[0].mxu0 %v1796
        %v2348 = vpop.f32.mrb[0].mxu0
        %v2349 = vadd.f32 0.0, %v2348
        %v2350 = vpop.f32.mrb[0].mxu0
        %v2351 = vadd.f32 0.0, %v2350
        %2352 = vmatprep.mubr.f32.mxu0 0.0
        %2353 = vmatmul.mubr.f32.gmra.mrb[0].mxu0 %v1795
        %v2354 = vpop.f32.mrb[0].mxu0
        %v2355 = vadd.f32 0.0, %v2354
        %v2356 = vpop.f32.mrb[0].mxu0
        %v2357 = vadd.f32 0.0, %v2356
        %2358 = vmatprep.mubr.f32.mxu0 0.0
        %2359 = vmatmul.mubr.f32.gmra.mrb[0].mxu0 %v1794
        %v2360 = vpop.f32.mrb[0].mxu0
        %v2361 = vadd.f32 0.0, %v2360
        %v2362 = vpop.f32.mrb[0].mxu0
        %v2363 = vadd.f32 0.0, %v2362
        %2364 = vmatprep.mubr.f32.mxu0 0.0
        %2365 = vmatmul.mubr.f32.gmra.mrb[0].mxu0 %v1793
        %v2366 = vpop.f32.mrb[0].mxu0
        %v2367 = vadd.f32 0.0, %v2366
        %v2368 = vpop.f32.mrb[0].mxu0
        %v2369 = vadd.f32 0.0, %v2368
        %2370 = vmatprep.mubr.f32.mxu0 0.0
        %2371 = vmatmul.mubr.f32.gmra.mrb[0].mxu0 %v1792
        %v2372 = vpop.f32.mrb[0].mxu0
        %v2373 = vadd.f32 0.0, %v2372
        %v2374 = vpop.f32.mrb[0].mxu0
        %v2375 = vadd.f32 0.0, %v2374
        %2376 = vmatprep.mubr.f32.mxu0 0.0
        %2377 = vmatmul.mubr.f32.gmra.mrb[0].mxu0 %v1791
        %v2378 = vpop.f32.mrb[0].mxu0
        %v2379 = vadd.f32 0.0, %v2378
        %v2380 = vpop.f32.mrb[0].mxu0
        %v2381 = vadd.f32 0.0, %v2380
        %2382 = vmatprep.mubr.f32.mxu0 0.0
        %2383 = vmatmul.mubr.f32.gmra.mrb[0].mxu0 %v1790
        %v2384 = vpop.f32.mrb[0].mxu0
        %v2385 = vadd.f32 0.0, %v2384
        %v2386 = vpop.f32.mrb[0].mxu0
        %v2387 = vadd.f32 0.0, %v2386
        %2388 = vmatprep.mubr.f32.mxu0 0.0
        %2389 = vmatmul.mubr.f32.gmra.mrb[0].mxu0 %v1789
        %v2390 = vpop.f32.mrb[0].mxu0
        %v2391 = vadd.f32 0.0, %v2390
        %v2392 = vpop.f32.mrb[0].mxu0
        %v2393 = vadd.f32 0.0, %v2392
        %2394 = vmatprep.mubr.f32.mxu0 0.0
        %2395 = vmatmul.mubr.f32.gmra.mrb[0].mxu0 %v1788
        %v2396 = vpop.f32.mrb[0].mxu0
        %v2397 = vadd.f32 0.0, %v2396
        %v2398 = vpop.f32.mrb[0].mxu0
        %v2399 = vadd.f32 0.0, %v2398
        %2400 = vmatprep.mubr.f32.mxu0 0.0
        %2401 = vmatmul.mubr.f32.gmra.mrb[0].mxu0 %v1787
        %v2402 = vpop.f32.mrb[0].mxu0
        %v2403 = vadd.f32 0.0, %v2402
        %v2404 = vpop.f32.mrb[0].mxu0
        %v2405 = vadd.f32 0.0, %v2404
        %2406 = vmatprep.mubr.f32.mxu0 0.0
        %2407 = vmatmul.mubr.f32.gmra.mrb[0].mxu0 %v1786
        %v2408 = vpop.f32.mrb[0].mxu0
        %v2409 = vadd.f32 0.0, %v2408
        %v2410 = vpop.f32.mrb[0].mxu0
        %v2411 = vadd.f32 0.0, %v2410
        %2412 = vmatprep.mubr.f32.mxu0 0.0
        %2413 = vmatmul.mubr.f32.gmra.mrb[0].mxu0 %v1803
        %v2414 = vpop.f32.mrb[0].mxu0
        %v2415 = vadd.f32 0.0, %v2414
        %v2416 = vpop.f32.mrb[0].mxu0
        %v2417 = vadd.f32 0.0, %v2416
        %2418 = vdwg.mxu0
        %v2419 = vadd.f32 %v2108, %v2313
        %v2420 = vadd.f32 %v2110, %v2315
        %v2421 = vadd.f32 %v2114, %v2319
        %v2422 = vadd.f32 %v2116, %v2321
        %v2423 = vadd.f32 %v2120, %v2325
        %v2424 = vadd.f32 %v2122, %v2327
        %v2425 = vadd.f32 %v2126, %v2331
        %v2426 = vadd.f32 %v2128, %v2333
        %v2427 = vadd.f32 %v2132, %v2337
        %v2428 = vadd.f32 %v2134, %v2339
        %v2429 = vadd.f32 %v2138, %v2343
        %v2430 = vadd.f32 %v2140, %v2345
        %v2431 = vadd.f32 %v2144, %v2349
        %v2432 = vadd.f32 %v2146, %v2351
        %v2433 = vadd.f32 %v2150, %v2355
        %v2434 = vadd.f32 %v2152, %v2357
        %v2435 = vadd.f32 %v2156, %v2361
        %v2436 = vadd.f32 %v2158, %v2363
        %v2437 = vadd.f32 %v2162, %v2367
        %v2438 = vadd.f32 %v2164, %v2369
        %v2439 = vadd.f32 %v2168, %v2373
        %v2440 = vadd.f32 %v2170, %v2375
        %v2441 = vadd.f32 %v2174, %v2379
        %v2442 = vadd.f32 %v2176, %v2381
        %v2443 = vadd.f32 %v2180, %v2385
        %v2444 = vadd.f32 %v2182, %v2387
        %v2445 = vadd.f32 %v2186, %v2391
        %v2446 = vadd.f32 %v2188, %v2393
        %v2447 = vadd.f32 %v2192, %v2397
        %v2448 = vadd.f32 %v2194, %v2399
        %v2449 = vadd.f32 %v2198, %v2403
        %v2450 = vadd.f32 %v2200, %v2405
        %v2451 = vadd.f32 %v2204, %v2409
        %v2452 = vadd.f32 %v2206, %v2411
        %v2453 = vadd.f32 %v2210, %v2415
        %v2454 = vadd.f32 %v2212, %v2417
        %v2455 = vld [vmem:[%s7] sm:$0x3]
        %v2457 = vlaneseq
        %v2458 = vshrl.u32 %v2457, 7
        %v2459 = vsub.s32 0, %v2458
        %v2460 = vrot.slane %v2455, %v2459
        %v2461 = vlaneseq
        %v2462 = vshrl.u32 %v2461, 7
        %v2463 = vsub.s32 1, %v2462
        %v2464 = vrot.slane %v2455, %v2463
        %v2467 = vadd.f32 %v2419, %v2460
        %v2468 = vadd.f32 %v2420, %v2464
        %v2469 = vadd.f32 %v2421, %v2460
        %v2470 = vadd.f32 %v2422, %v2464
        %v2471 = vadd.f32 %v2423, %v2460
        %v2472 = vadd.f32 %v2424, %v2464
        %v2473 = vadd.f32 %v2425, %v2460
        %v2474 = vadd.f32 %v2426, %v2464
        %v2475 = vadd.f32 %v2427, %v2460
        %v2476 = vadd.f32 %v2428, %v2464
        %v2477 = vadd.f32 %v2429, %v2460
        %v2478 = vadd.f32 %v2430, %v2464
        %v2479 = vadd.f32 %v2431, %v2460
        %v2480 = vadd.f32 %v2432, %v2464
        %v2481 = vadd.f32 %v2433, %v2460
        %v2482 = vadd.f32 %v2434, %v2464
        %v2483 = vadd.f32 %v2435, %v2460
        %v2484 = vadd.f32 %v2436, %v2464
        %v2485 = vadd.f32 %v2437, %v2460
        %v2486 = vadd.f32 %v2438, %v2464
        %v2487 = vadd.f32 %v2439, %v2460
        %v2488 = vadd.f32 %v2440, %v2464
        %v2489 = vadd.f32 %v2441, %v2460
        %v2490 = vadd.f32 %v2442, %v2464
        %v2491 = vadd.f32 %v2443, %v2460
        %v2492 = vadd.f32 %v2444, %v2464
        %v2493 = vadd.f32 %v2445, %v2460
        %v2494 = vadd.f32 %v2446, %v2464
        %v2495 = vadd.f32 %v2447, %v2460
        %v2496 = vadd.f32 %v2448, %v2464
        %v2497 = vadd.f32 %v2449, %v2460
        %v2498 = vadd.f32 %v2450, %v2464
        %v2499 = vadd.f32 %v2451, %v2460
        %v2500 = vadd.f32 %v2452, %v2464
        %v2501 = vadd.f32 %v2453, %v2460
        %v2502 = vadd.f32 %v2454, %v2464
        %v2503 = vmax.f32 %v2467, 0.0
        %v2504 = vmax.f32 %v2468, 0.0
        %v2505 = vmax.f32 %v2469, 0.0
        %v2506 = vmax.f32 %v2470, 0.0
        %v2507 = vmax.f32 %v2471, 0.0
        %v2508 = vmax.f32 %v2472, 0.0
        %v2509 = vmax.f32 %v2473, 0.0
        %v2510 = vmax.f32 %v2474, 0.0
        %v2511 = vmax.f32 %v2475, 0.0
        %v2512 = vmax.f32 %v2476, 0.0
        %v2513 = vmax.f32 %v2477, 0.0
        %v2514 = vmax.f32 %v2478, 0.0
        %v2515 = vmax.f32 %v2479, 0.0
        %v2516 = vmax.f32 %v2480, 0.0
        %v2517 = vmax.f32 %v2481, 0.0
        %v2518 = vmax.f32 %v2482, 0.0
        %v2519 = vmax.f32 %v2483, 0.0
        %v2520 = vmax.f32 %v2484, 0.0
        %v2521 = vmax.f32 %v2485, 0.0
        %v2522 = vmax.f32 %v2486, 0.0
        %v2523 = vmax.f32 %v2487, 0.0
        %v2524 = vmax.f32 %v2488, 0.0
        %v2525 = vmax.f32 %v2489, 0.0
        %v2526 = vmax.f32 %v2490, 0.0
        %v2527 = vmax.f32 %v2491, 0.0
        %v2528 = vmax.f32 %v2492, 0.0
        %v2529 = vmax.f32 %v2493, 0.0
        %v2530 = vmax.f32 %v2494, 0.0
        %v2531 = vmax.f32 %v2495, 0.0
        %v2532 = vmax.f32 %v2496, 0.0
        %v2533 = vmax.f32 %v2497, 0.0
        %v2534 = vmax.f32 %v2498, 0.0
        %v2535 = vmax.f32 %v2499, 0.0
        %v2536 = vmax.f32 %v2500, 0.0
        %v2537 = vmax.f32 %v2501, 0.0
        %v2538 = vmax.f32 %v2502, 0.0
        %v2539 = vlaneseq
        %v2540 = vand.u32 %v2539, 127
        %v2541 = vadd.s32 %v2540, 128
        %v2542 = vmul.u32 %v377, 18
        %v2543 = vadd.s32 %v2542, 1
        %vm2544 = vcmp.ge.s32.totalorder %v2540, %v2543
        %vm2545 = vcmp.ge.s32.totalorder %v2541, %v2543
        %v2546 = vadd.s32 %v2542, 16
        %vm2547 = vcmp.le.s32.totalorder %v2540, %v2546
        %vm2548 = vcmp.le.s32.totalorder %v2541, %v2546
        %vm2549 = vmand %vm2544, %vm2547
        %vm2550 = vmand %vm2545, %vm2548
        %v2551 = vsel %vm2549, 0.0625, 0.0
        %v2552 = vsel %vm2550, 0.0625, 0.0
        %vm2553 = vcmask 130048
        %v2555 = vsel %vm2553, %v2552, 0
        %2557 = vmatprep.subr.mxu0 %v2504
        %2558 = vmatpush1.msra.mxu0 %v2503
        %2559 = vmatprep.subr.mxu0 %v2506
        %2560 = vmatpush1.msra.mxu0 %v2505
        %2561 = vmatprep.subr.mxu0 %v2508
        %2562 = vmatpush1.msra.mxu0 %v2507
        %2563 = vmatprep.subr.mxu0 %v2510
        %2564 = vmatpush1.msra.mxu0 %v2509
        %2565 = vmatprep.subr.mxu0 %v2512
        %2566 = vmatpush1.msra.mxu0 %v2511
        %2567 = vmatprep.subr.mxu0 %v2514
        %2568 = vmatpush1.msra.mxu0 %v2513
        %2569 = vmatprep.subr.mxu0 %v2516
        %2570 = vmatpush1.msra.mxu0 %v2515
        %2571 = vmatprep.subr.mxu0 %v2518
        %2572 = vmatpush1.msra.mxu0 %v2517
        %2573 = vmatprep.subr.mxu0 %v2520
        %2574 = vmatpush1.msra.mxu0 %v2519
        %2575 = vmatprep.subr.mxu0 %v2522
        %2576 = vmatpush1.msra.mxu0 %v2521
        %2577 = vmatprep.subr.mxu0 %v2524
        %2578 = vmatpush1.msra.mxu0 %v2523
        %2579 = vmatprep.subr.mxu0 %v2526
        %2580 = vmatpush1.msra.mxu0 %v2525
        %2581 = vmatprep.subr.mxu0 %v2528
        %2582 = vmatpush1.msra.mxu0 %v2527
        %2583 = vmatprep.subr.mxu0 %v2530
        %2584 = vmatpush1.msra.mxu0 %v2529
        %2585 = vmatprep.subr.mxu0 %v2532
        %2586 = vmatpush1.msra.mxu0 %v2531
        %2587 = vmatprep.subr.mxu0 %v2534
        %2588 = vmatpush1.msra.mxu0 %v2533
        %2589 = vmatprep.subr.mxu0 %v2536
        %2590 = vmatpush1.msra.mxu0 %v2535
        %2591 = vmatprep.subr.mxu0 %v2538
        %2592 = vmatpush1.msra.mxu0 %v2537
        %2593 = vmatprep.subr.mxu0 0.0
        %2594 = vmatpush1.msra.mxu0 0.0
        %2595 = vmatprep.subr.mxu0 0.0
        %2596 = vmatpush1.msra.mxu0 0.0
        %2597 = vmatprep.subr.mxu0 0.0
        %2598 = vmatpush1.msra.mxu0 0.0
        %2599 = vmatprep.subr.mxu0 0.0
        %2600 = vmatpush1.msra.mxu0 0.0
        %2601 = vmatprep.subr.mxu0 0.0
        %2602 = vmatpush1.msra.mxu0 0.0
        %2603 = vmatprep.subr.mxu0 0.0
        %2604 = vmatpush1.msra.mxu0 0.0
        %2605 = vmatprep.subr.mxu0 0.0
        %2606 = vmatpush1.msra.mxu0 0.0
        %2607 = vmatprep.subr.mxu0 0.0
        %2608 = vmatpush1.msra.mxu0 0.0
        %2609 = vmatprep.subr.mxu0 0.0
        %2610 = vmatpush1.msra.mxu0 0.0
        %2611 = vmatprep.subr.mxu0 0.0
        %2612 = vmatpush1.msra.mxu0 0.0
        %2613 = vmatprep.subr.mxu0 0.0
        %2614 = vmatpush1.msra.mxu0 0.0
        %2615 = vmatprep.subr.mxu0 0.0
        %2616 = vmatpush1.msra.mxu0 0.0
        %2617 = vmatprep.subr.mxu0 0.0
        %2618 = vmatpush1.msra.mxu0 0.0
        %2619 = vmatprep.subr.mxu0 0.0
        %2620 = vmatpush1.msra.mxu0 0.0
        %2621 = vmatprep.mubr.f32.mxu0 %v2555
        %2622 = vmatmul.mubr.f32.gmra.mrb[0].mxu0 %v2551
        %v2623 = vpop.f32.mrb[0].mxu0
        %v2624 = vadd.f32 0.0, %v2623
        %v2625 = vpop.f32.mrb[0].mxu0
        %v2626 = vadd.f32 0.0, %v2625
        %2627 = vdwg.mxu0
        %2628 = vst [vmem:[%s314] sm:$0xff] %v2624
        %2629 = vst [vmem:[%s314 + $0x8] sm:$0xff] %v2626
        %s2630 = sand.u32 %s204, 1
        %s2631 = scalar_lea.sflag [#allocation4], %s2630
        %s2632 = sand.u32 %s204, 1
        %s2633 = smul.addr %s2632, 16
        %s2634 = scalar_lea.vmem [#allocation5], %s2633
        // Predicated region
        $region57: #{tpu_custom_call.1} parent=51 // pred_check
          %p2635 = pneg %p214
        $region58: #{tpu_custom_call.1} parent=51 // pred_check_branch
          %2637 = sbr.rel (%p2635) target = $region60
        $region59: #{tpu_custom_call.1} parent=51 // pred_region
          %s2639 = ssub.s32 256, 256
          %2640 = vsyncadd %s2631, %s2639
          %s2641 = smul.addr %s23, 2
          %s2642 = smul.addr %s2641, 128
          %s2643 = scalar_lea.hbm %s8, %s2642
          %s2645 = sshll.u32 %s2634, 4
          %s2646 = int_to_ptr.vmem [resolvable:$true] %s2645
          %2648 = dma.vmem_to_hbm [thread:$0]  %s2646, 256, %s2643, %s2631
        $region60: #{tpu_custom_call.1} parent=51 // pred_fallthru
          _
      $region52: #{tpu_custom_call.1} parent=5 // pred_fallthru
        _
      %p2649 = scmp.le.s32.totalorder 2, %s18
      // Predicated region
      $region61: #{tpu_custom_call.1} parent=5 // pred_check
        %p2650 = pneg %p2649
      $region62: #{tpu_custom_call.1} parent=5 // pred_check_branch
        %2652 = sbr.rel (%p2650) target = $region64
      $region63: #{tpu_custom_call.1} parent=5 // pred_region
        %s2653 = ssub.s32 %s18, 2
        // Predicated region
        $region65: #{tpu_custom_call.1} parent=63 // pred_check
          %p2654 = pneg %p220
        $region66: #{tpu_custom_call.1} parent=63 // pred_check_branch
          %2656 = sbr.rel (%p2654) target = $region68
        $region67: #{tpu_custom_call.1} parent=63 // pred_region
          %s2657 = sand.u32 %s205, 1
          %s2658 = scalar_lea.sflag [#allocation4], %s2657
          %s2659 = sand.u32 %s205, 1
          %s2660 = smul.addr %s2659, 16
          %s2661 = scalar_lea.vmem [#allocation5], %s2660
          %2662 = dma.done %s2658, 256
        $region68: #{tpu_custom_call.1} parent=63 // pred_fallthru
          _
      $region64: #{tpu_custom_call.1} parent=5 // pred_fallthru
        _
    $region6: #{tpu_custom_call.1} parent=1 // loop_footer
      %s22 = sadd.s32 1, %s18
    $region7: #{tpu_custom_call.1} parent=1 // loop_footer_branch
      %17 = sbr.rel target = $region3
    $region8: #{tpu_custom_call.1} parent=1 // loop_exit
      _
    %2663 = vsyncpa [#allocation3], 1
    %s2664 = scalar_lea.sflag [#allocation3], 1
    %2665 = vsyncpa %s2664, 1
    %2666 = vsyncpa [#allocation4], 1
    %s2667 = scalar_lea.sflag [#allocation4], 1
    %2668 = vsyncpa %s2667, 1

</llo_original>
